<compile_context>
chip_gen: v5e
topology: v5e:2x2
jax: 0.10.0
libtpu: 0.0.40
codegen_flags: <defaults>
</compile_context>

<pallas_src>
import jax
import jax.numpy as jnp
from jax.experimental import pallas as pl
from jax.experimental.pallas import tpu as pltpu


def _round_up(x, m):
    return ((x + m - 1) // m) * m


def _cdiv(a, b):
    return -(-a // b)


# ---------------------------------------------------------------------------
# Pallas kernel: one time-chunk of the GRU per grid step; hidden state persists
# across time chunks in the resident hout block.
# ---------------------------------------------------------------------------
def _make_gru_kernel(t_total, unroll, needs_mask):
    def kernel(x_ref, h0_ref, wih_ref, whh_ref, bi_ref, bhn_ref,
               out_ref, hout_ref, gi_ref):
        CT, BB, Hp = out_ref.shape
        tc = pl.program_id(1)

        # Initialize the resident hidden-state carry at the first time chunk.
        @pl.when(tc == 0)
        def _():
            hout_ref[...] = h0_ref[...]

        # (1) Hoisted input projection for the whole chunk: one bf16 MXU GEMM.
        x_flat = x_ref[...].reshape(CT * BB, Hp)                       # bf16
        gi = jnp.dot(x_flat, wih_ref[...], preferred_element_type=jnp.float32)
        gi_ref[...] = (gi + bi_ref[...]).reshape(CT, BB, 3 * Hp)       # f32 slab

        # (2) Serial recurrence; h carried in vregs, one lane-dense store per step.
        whh = whh_ref[...]                                             # bf16, resident
        bhn = jnp.broadcast_to(bhn_ref[...], (BB, Hp))                 # hoisted broadcast
        chunk_start = tc * CT

        def step(i, h):
            gi_t = gi_ref[i]                                           # (BB, 3Hp) f32
            gh = jnp.dot(h.astype(whh.dtype), whh,
                         preferred_element_type=jnp.float32)           # (BB, 3Hp) f32
            # PyTorch gate order r, z, n; gate slices are 128-lane aligned.
            r = jax.nn.sigmoid(gi_t[:, :Hp] + gh[:, :Hp])
            z = jax.nn.sigmoid(gi_t[:, Hp:2 * Hp] + gh[:, Hp:2 * Hp])
            n = jnp.tanh(gi_t[:, 2 * Hp:] + r * (gh[:, 2 * Hp:] + bhn))
            h_new = n + z * (h - n)                                    # == (1-z)*n + z*h
            out_ref[i] = h_new                                         # lane-dense store
            if needs_mask:
                # Padded (beyond T) steps must not advance the carried hidden state.
                h_new = jnp.where(chunk_start + i < t_total, h_new, h)
            return h_new

        h = jax.lax.fori_loop(0, CT, step, hout_ref[...], unroll=unroll)
        hout_ref[...] = h

    return kernel


def gru_forward(x_tbh, h0, w_ih_t, w_hh_t, b_i, b_hn, *, t_total, ct, bb):
    """x_tbh: (Tp, Bp, Hp) bf16 time-major; weights (Hp, 3Hp) bf16; biases f32."""
    Tp, Bp, Hp = x_tbh.shape
    NT = Tp // ct
    NB = Bp // bb
    unroll = max(1, min(ct, 8))
    needs_mask = (Tp != t_total)

    kernel = _make_gru_kernel(t_total, unroll, needs_mask)

    # Explicit VMEM budget (double-buffered streams + resident weights + gi scratch).
    vmem_bytes = (
        2 * ct * bb * Hp * 2          # x chunk (bf16, double-buffered)
        + 2 * ct * bb * Hp * 4        # out chunk (f32, double-buffered)
        + 4 * bb * Hp * 4             # h0 + hout
        + 2 * 2 * Hp * 3 * Hp * 2     # w_ih + w_hh (bf16)
        + 2 * 4 * (3 * Hp + Hp)       # biases
        + ct * bb * 3 * Hp * 4        # gi scratch
    )
    vmem_limit = int(min(max(2 * vmem_bytes, 32 * 1024 * 1024), 96 * 1024 * 1024))

    out_tbh, h_last = pl.pallas_call(
        kernel,
        out_shape=(jax.ShapeDtypeStruct((Tp, Bp, Hp), jnp.float32),
                   jax.ShapeDtypeStruct((Bp, Hp), jnp.float32)),
        grid_spec=pltpu.PrefetchScalarGridSpec(
            num_scalar_prefetch=0,
            grid=(NB, NT),
            in_specs=[
                pl.BlockSpec((ct, bb, Hp), lambda b, t: (t, b, 0)),      # x
                pl.BlockSpec((bb, Hp), lambda b, t: (b, 0)),             # h0
                pl.BlockSpec((Hp, 3 * Hp), lambda b, t: (0, 0)),         # W_ih^T (resident)
                pl.BlockSpec((Hp, 3 * Hp), lambda b, t: (0, 0)),         # W_hh^T (resident)
                pl.BlockSpec((1, 3 * Hp), lambda b, t: (0, 0)),          # combined input bias
                pl.BlockSpec((1, Hp), lambda b, t: (0, 0)),              # n-gate hidden bias
            ],
            out_specs=[
                pl.BlockSpec((ct, bb, Hp), lambda b, t: (t, b, 0)),      # outputs (streamed)
                pl.BlockSpec((bb, Hp), lambda b, t: (b, 0)),             # hidden carry (resident)
            ],
            scratch_shapes=[pltpu.VMEM((ct, bb, 3 * Hp), jnp.float32)],  # per-chunk input gates
        ),
        compiler_params=pltpu.CompilerParams(
            dimension_semantics=("parallel", "arbitrary"),
            vmem_limit_bytes=vmem_limit),
    )(x_tbh, h0, w_ih_t, w_hh_t, b_i, b_hn)
    return out_tbh, h_last


# ---------------------------------------------------------------------------
# Wrapper module (Embedding + GRU), PyTorch-compatible layout.
# ---------------------------------------------------------------------------
class EncoderRNNPallas:
    """JAX/Pallas port of the PyTorch EncoderRNN (Embedding + GRU, batch_first)."""

    LANE = 128
    SUBLANE = 8
    MAX_TIME_CHUNK = 64     # VMEM residency per chunk ~ 18*CT*BB*Hp bytes
    MAX_BATCH_BLOCK = 64

    def __init__(self, input_size, hidden_size, key):
        self.hidden_size = H = hidden_size
        self.hidden_pad = Hp = max(self.LANE, _round_up(H, self.LANE))

        k_emb, k_wih, k_whh, k_bih, k_bhh = jax.random.split(key, 5)
        scale = 1.0 / jnp.sqrt(jnp.float32(H))

        # Raw parameters in PyTorch layout (used by the pure-JAX reference).
        self.embedding = jax.random.normal(k_emb, (input_size, H), jnp.float32)
        self.w_ih = jax.random.uniform(k_wih, (3 * H, H), jnp.float32, -scale, scale)
        self.w_hh = jax.random.uniform(k_whh, (3 * H, H), jnp.float32, -scale, scale)
        self.b_ih = jax.random.uniform(k_bih, (3 * H,), jnp.float32, -scale, scale)
        self.b_hh = jax.random.uniform(k_bhh, (3 * H,), jnp.float32, -scale, scale)

        # Kernel-side parameters: zero-padded to lane width, transposed to (Hp, 3Hp),
        # each gate in its own 128-lane-aligned column block; bf16 MXU operands.
        self.emb_padded = (jnp.zeros((input_size, Hp), jnp.float32)
                           .at[:, :H].set(self.embedding).astype(jnp.bfloat16))
        self.w_ih_p = self._pad_gate_weight(self.w_ih, H, Hp).astype(jnp.bfloat16)
        self.w_hh_p = self._pad_gate_weight(self.w_hh, H, Hp).astype(jnp.bfloat16)
        # b_hh for r/z gates folded into the input bias (only b_hn must stay inside
        # the recurrence: n = tanh(i_n + b_in + r*(h_n + b_hn))).
        self.b_i_p = self._pad_combined_bias(self.b_ih, self.b_hh, H, Hp)
        self.b_hn_p = (jnp.zeros((1, Hp), jnp.float32)
                       .at[0, :H].set(self.b_hh[2 * H:3 * H]))

    @staticmethod
    def _pad_gate_weight(w, H, Hp):
        out = jnp.zeros((Hp, 3 * Hp), jnp.float32)
        for g in range(3):
            out = out.at[:H, g * Hp:g * Hp + H].set(w[g * H:(g + 1) * H, :].T)
        return out

    @staticmethod
    def _pad_combined_bias(b_ih, b_hh, H, Hp):
        out = jnp.zeros((1, 3 * Hp), jnp.float32)
        for g in range(3):
            seg = b_ih[g * H:(g + 1) * H]
            if g < 2:                                   # r and z gates: fold hidden bias in
                seg = seg + b_hh[g * H:(g + 1) * H]
            out = out.at[0, g * Hp:g * Hp + H].set(seg)
        return out

    def __call__(self, input_index, hidden=None):
        # input_index: (B, T) int32
        B, T = input_index.shape
        H, Hp = self.hidden_size, self.hidden_pad

        # Batch block (multiple of 8; >1 block enables dual-TC sharding on v7x) and padding.
        BB = min(max(self.SUBLANE, _round_up(B, self.SUBLANE)), self.MAX_BATCH_BLOCK)
        Bp = _round_up(max(B, BB), BB)
        # Time chunking with minimal padding (at most NT-1 padded steps).
        NT = _cdiv(T, self.MAX_TIME_CHUNK)
        CT = _cdiv(T, NT)
        Tp = NT * CT

        # Embedding gather directly in time-major layout (no activation transpose);
        # padded embedding columns are zero so padded hidden channels stay exactly zero.
        idx_t = jnp.transpose(input_index)                            # (T, B)
        x = jnp.take(self.emb_padded, idx_t, axis=0)                  # (T, B, Hp) bf16
        if Tp != T or Bp != B:
            x = jnp.pad(x, ((0, Tp - T), (0, Bp - B), (0, 0)))        # (Tp, Bp, Hp)

        if hidden is None:
            h0 = jnp.zeros((Bp, Hp), jnp.float32)
        else:
            h0 = jnp.zeros((Bp, Hp), jnp.float32).at[:B, :H].set(
                hidden.reshape(B, H).astype(jnp.float32))

        out_tbh, h_last = gru_forward(x, h0, self.w_ih_p, self.w_hh_p,
                                      self.b_i_p, self.b_hn_p,
                                      t_total=T, ct=CT, bb=BB)

        output = jnp.transpose(out_tbh[:T, :B, :H], (1, 0, 2))        # (B, T, H) batch_first
        hidden_out = h_last[:B, :H].reshape(1, B, H)                  # (num_layers=1, B, H)
        return output, hidden_out


# ---------------------------------------------------------------------------
# Pure-JAX reference (PyTorch GRU semantics) for correctness checking.
# ---------------------------------------------------------------------------
def gru_reference(model, input_index, hidden=None):
    H = model.hidden_size
    x = jnp.take(model.embedding, input_index, axis=0)                # (B, T, H) f32
    B, T, _ = x.shape
    h0 = jnp.zeros((B, H), jnp.float32) if hidden is None else hidden.reshape(B, H)

    def step(h, x_t):
        gi = x_t @ model.w_ih.T + model.b_ih
        gh = h @ model.w_hh.T + model.b_hh
        i_r, i_z, i_n = gi[:, :H], gi[:, H:2 * H], gi[:, 2 * H:]
        h_r, h_z, h_n = gh[:, :H], gh[:, H:2 * H], gh[:, 2 * H:]
        r = jax.nn.sigmoid(i_r + h_r)
        z = jax.nn.sigmoid(i_z + h_z)
        n = jnp.tanh(i_n + r * h_n)
        h_new = (1.0 - z) * n + z * h
        return h_new, h_new

    h_last, ys = jax.lax.scan(step, h0, jnp.transpose(x, (1, 0, 2)))
    return jnp.transpose(ys, (1, 0, 2)), h_last.reshape(1, B, H)


if __name__ == "__main__":
    key = jax.random.PRNGKey(0)
    k_params, k_idx = jax.random.split(key)

    V, H = 16, 32        # input_size (vocab), hidden_size
    B, T = 2, 8          # batch, sequence length

    model = EncoderRNNPallas(V, H, k_params)
    input_index = jax.random.randint(k_idx, (B, T), 0, V, dtype=jnp.int32)

    output, hidden = model(input_index)
    jax.block_until_ready((output, hidden))

    assert output.shape == (B, T, H)
    assert hidden.shape == (1, B, H)

    # Correctness check against a pure-JAX f32 GRU reference (tolerance covers bf16 MXU operands).
    ref_out, ref_hidden = gru_reference(model, input_index)
    assert float(jnp.max(jnp.abs(output - ref_out))) < 5e-2
    assert float(jnp.max(jnp.abs(hidden - ref_hidden))) < 5e-2

    print("KERNEL_OK")
</pallas_src>

<mosaic_0001>
module attributes {stable_mosaic.version = 11 : i64} {
  func.func @kernel(%arg0: i32, %arg1: i32, %arg2: memref<8x8x128xbf16, #tpu.memory_space<vmem>>, %arg3: memref<8x128xf32, #tpu.memory_space<vmem>>, %arg4: memref<128x384xbf16, #tpu.memory_space<vmem>>, %arg5: memref<128x384xbf16, #tpu.memory_space<vmem>>, %arg6: memref<1x384xf32, #tpu.memory_space<vmem>>, %arg7: memref<1x128xf32, #tpu.memory_space<vmem>>, %arg8: memref<8x8x128xf32, #tpu.memory_space<vmem>>, %arg9: memref<8x128xf32, #tpu.memory_space<vmem>>, %arg10: memref<8x8x384xf32, #tpu.memory_space<vmem>>) attributes {dimension_semantics = [#tpu.dimension_semantics<parallel>, #tpu.dimension_semantics<arbitrary>], iteration_bounds = array<i64: 1, 1>, scalar_prefetch = 0 : i64, scratch_operands = 1 : i64, tpu.core_type = #tpu.core_type<tc>, window_params = [{transform_indices = @transform_0, window_bounds = array<i64: 8, 8, 128>}, {transform_indices = @transform_1, window_bounds = array<i64: 8, 128>}, {pipeline_mode = #tpu.pipeline_mode<synchronous>, transform_indices = @transform_2, window_bounds = array<i64: 128, 384>}, {pipeline_mode = #tpu.pipeline_mode<synchronous>, transform_indices = @transform_3, window_bounds = array<i64: 128, 384>}, {pipeline_mode = #tpu.pipeline_mode<synchronous>, transform_indices = @transform_4, window_bounds = array<i64: 1, 384>}, {pipeline_mode = #tpu.pipeline_mode<synchronous>, transform_indices = @transform_5, window_bounds = array<i64: 1, 128>}, {transform_indices = @transform_6, window_bounds = array<i64: 8, 8, 128>}, {transform_indices = @transform_7, window_bounds = array<i64: 8, 128>}]} {
    %c0_i32 = arith.constant 0 : i32
    %0 = arith.cmpi eq, %arg1, %c0_i32 : i32
    %1 = arith.extui %0 : i1 to i32
    %c0_i32_0 = arith.constant 0 : i32
    %2 = arith.cmpi ne, %1, %c0_i32_0 : i32
    scf.if %2 {
      %c0_75 = arith.constant 0 : index
      %c0_76 = arith.constant 0 : index
      %290 = vector.load %arg3[%c0_75, %c0_76] : memref<8x128xf32, #tpu.memory_space<vmem>>, vector<8x128xf32>
      %c0_77 = arith.constant 0 : index
      %c0_78 = arith.constant 0 : index
      %291 = vector.load %arg9[%c0_77, %c0_78] : memref<8x128xf32, #tpu.memory_space<vmem>>, vector<8x128xf32>
      tpu.vector_store %arg9[%c0_77, %c0_78], %290 {strides = array<i32>} : memref<8x128xf32, #tpu.memory_space<vmem>>, vector<8x128xf32>,
    } else {
    }
    %c0 = arith.constant 0 : index
    %c0_1 = arith.constant 0 : index
    %c0_2 = arith.constant 0 : index
    %3 = vector.load %arg2[%c0, %c0_1, %c0_2] : memref<8x8x128xbf16, #tpu.memory_space<vmem>>, vector<8x8x128xbf16>
    %4 = vector.shape_cast %3 : vector<8x8x128xbf16> to vector<64x128xbf16>
    %c0_3 = arith.constant 0 : index
    %c0_4 = arith.constant 0 : index
    %5 = vector.load %arg4[%c0_3, %c0_4] : memref<128x384xbf16, #tpu.memory_space<vmem>>, vector<128x384xbf16>
    %cst = arith.constant dense<0.000000e+00> : vector<64x384xf32>
    %6 = tpu.matmul %4, %5, %cst {dimension_numbers = #tpu.dot_dimension_numbers<[1], [0], [0], [1], [0, 0, 1, 1], [], []>} : vector<64x128xbf16>, vector<128x384xbf16>, vector<64x384xf32> -> vector<64x384xf32>
    %c0_5 = arith.constant 0 : index
    %c0_6 = arith.constant 0 : index
    %7 = vector.load %arg6[%c0_5, %c0_6] : memref<1x384xf32, #tpu.memory_space<vmem>>, vector<1x384xf32>
    %8 = vector.broadcast %7 : vector<1x384xf32> to vector<64x384xf32>
    %9 = arith.addf %6, %8 : vector<64x384xf32>
    %10 = vector.shape_cast %9 : vector<64x384xf32> to vector<8x8x384xf32>
    %c0_7 = arith.constant 0 : index
    %c0_8 = arith.constant 0 : index
    %c0_9 = arith.constant 0 : index
    %11 = vector.load %arg10[%c0_7, %c0_8, %c0_9] : memref<8x8x384xf32, #tpu.memory_space<vmem>>, vector<8x8x384xf32>
    tpu.vector_store %arg10[%c0_7, %c0_8, %c0_9], %10 {strides = array<i32>} : memref<8x8x384xf32, #tpu.memory_space<vmem>>, vector<8x8x384xf32>,
    %c0_10 = arith.constant 0 : index
    %c0_11 = arith.constant 0 : index
    %12 = vector.load %arg5[%c0_10, %c0_11] : memref<128x384xbf16, #tpu.memory_space<vmem>>, vector<128x384xbf16>
    %c0_12 = arith.constant 0 : index
    %c0_13 = arith.constant 0 : index
    %13 = vector.load %arg7[%c0_12, %c0_13] : memref<1x128xf32, #tpu.memory_space<vmem>>, vector<1x128xf32>
    %14 = vector.shape_cast %13 : vector<1x128xf32> to vector<1x128xf32>
    %15 = vector.broadcast %14 : vector<1x128xf32> to vector<8x128xf32>
    %c0_14 = arith.constant 0 : index
    %c0_15 = arith.constant 0 : index
    %16 = vector.load %arg9[%c0_14, %c0_15] : memref<8x128xf32, #tpu.memory_space<vmem>>, vector<8x128xf32>
    %c0_i32_16 = arith.constant 0 : i32
    %17 = arith.index_cast %c0_i32_16 : i32 to index
    %c0_17 = arith.constant 0 : index
    %c0_18 = arith.constant 0 : index
    %18 = vector.load %arg10[%17, %c0_17, %c0_18] : memref<8x8x384xf32, #tpu.memory_space<vmem>>, vector<1x8x384xf32>
    %19 = vector.shape_cast %18 : vector<1x8x384xf32> to vector<8x384xf32>
    %20 = arith.truncf %16 : vector<8x128xf32> to vector<8x128xbf16>
    %cst_19 = arith.constant dense<0.000000e+00> : vector<8x384xf32>
    %21 = tpu.matmul %20, %12, %cst_19 {dimension_numbers = #tpu.dot_dimension_numbers<[1], [0], [0], [1], [0, 0, 1, 1], [], []>} : vector<8x128xbf16>, vector<128x384xbf16>, vector<8x384xf32> -> vector<8x384xf32>
    %22 = vector.extract_strided_slice %19 {offsets = [0, 0], sizes = [8, 128], strides = [1, 1]} : vector<8x384xf32> to vector<8x128xf32>
    %23 = vector.extract_strided_slice %21 {offsets = [0, 0], sizes = [8, 128], strides = [1, 1]} : vector<8x384xf32> to vector<8x128xf32>
    %24 = arith.addf %22, %23 : vector<8x128xf32>
    %25 = arith.negf %24 : vector<8x128xf32>
    %26 = math.exp %25 : vector<8x128xf32>
    %cst_20 = arith.constant 1.000000e+00 : f32
    %27 = vector.broadcast %cst_20 : f32 to vector<8x128xf32>
    %28 = arith.addf %27, %26 : vector<8x128xf32>
    %29 = arith.divf %27, %28 : vector<8x128xf32>
    %30 = vector.extract_strided_slice %19 {offsets = [0, 128], sizes = [8, 128], strides = [1, 1]} : vector<8x384xf32> to vector<8x128xf32>
    %31 = vector.extract_strided_slice %21 {offsets = [0, 128], sizes = [8, 128], strides = [1, 1]} : vector<8x384xf32> to vector<8x128xf32>
    %32 = arith.addf %30, %31 : vector<8x128xf32>
    %33 = arith.negf %32 : vector<8x128xf32>
    %34 = math.exp %33 : vector<8x128xf32>
    %cst_21 = arith.constant 1.000000e+00 : f32
    %35 = vector.broadcast %cst_21 : f32 to vector<8x128xf32>
    %36 = arith.addf %35, %34 : vector<8x128xf32>
    %37 = arith.divf %35, %36 : vector<8x128xf32>
    %38 = vector.extract_strided_slice %19 {offsets = [0, 256], sizes = [8, 128], strides = [1, 1]} : vector<8x384xf32> to vector<8x128xf32>
    %39 = vector.extract_strided_slice %21 {offsets = [0, 256], sizes = [8, 128], strides = [1, 1]} : vector<8x384xf32> to vector<8x128xf32>
    %40 = arith.addf %39, %15 : vector<8x128xf32>
    %41 = arith.mulf %29, %40 : vector<8x128xf32>
    %42 = arith.addf %38, %41 : vector<8x128xf32>
    %43 = math.tanh %42 : vector<8x128xf32>
    %44 = arith.subf %16, %43 : vector<8x128xf32>
    %45 = arith.mulf %37, %44 : vector<8x128xf32>
    %46 = arith.addf %43, %45 : vector<8x128xf32>
    %47 = arith.index_cast %c0_i32_16 : i32 to index
    %c0_22 = arith.constant 0 : index
    %c0_23 = arith.constant 0 : index
    %48 = vector.load %arg8[%47, %c0_22, %c0_23] : memref<8x8x128xf32, #tpu.memory_space<vmem>>, vector<1x8x128xf32>
    %49 = vector.shape_cast %48 : vector<1x8x128xf32> to vector<8x128xf32>
    %50 = vector.shape_cast %46 : vector<8x128xf32> to vector<1x8x128xf32>
    tpu.vector_store %arg8[%47, %c0_22, %c0_23], %50 {strides = array<i32>} : memref<8x8x128xf32, #tpu.memory_space<vmem>>, vector<1x8x128xf32>,
    %c1_i32 = arith.constant 1 : i32
    %51 = arith.index_cast %c1_i32 : i32 to index
    %c0_24 = arith.constant 0 : index
    %c0_25 = arith.constant 0 : index
    %52 = vector.load %arg10[%51, %c0_24, %c0_25] : memref<8x8x384xf32, #tpu.memory_space<vmem>>, vector<1x8x384xf32>
    %53 = vector.shape_cast %52 : vector<1x8x384xf32> to vector<8x384xf32>
    %54 = arith.truncf %46 : vector<8x128xf32> to vector<8x128xbf16>
    %cst_26 = arith.constant dense<0.000000e+00> : vector<8x384xf32>
    %55 = tpu.matmul %54, %12, %cst_26 {dimension_numbers = #tpu.dot_dimension_numbers<[1], [0], [0], [1], [0, 0, 1, 1], [], []>} : vector<8x128xbf16>, vector<128x384xbf16>, vector<8x384xf32> -> vector<8x384xf32>
    %56 = vector.extract_strided_slice %53 {offsets = [0, 0], sizes = [8, 128], strides = [1, 1]} : vector<8x384xf32> to vector<8x128xf32>
    %57 = vector.extract_strided_slice %55 {offsets = [0, 0], sizes = [8, 128], strides = [1, 1]} : vector<8x384xf32> to vector<8x128xf32>
    %58 = arith.addf %56, %57 : vector<8x128xf32>
    %59 = arith.negf %58 : vector<8x128xf32>
    %60 = math.exp %59 : vector<8x128xf32>
    %cst_27 = arith.constant 1.000000e+00 : f32
    %61 = vector.broadcast %cst_27 : f32 to vector<8x128xf32>
    %62 = arith.addf %61, %60 : vector<8x128xf32>
    %63 = arith.divf %61, %62 : vector<8x128xf32>
    %64 = vector.extract_strided_slice %53 {offsets = [0, 128], sizes = [8, 128], strides = [1, 1]} : vector<8x384xf32> to vector<8x128xf32>
    %65 = vector.extract_strided_slice %55 {offsets = [0, 128], sizes = [8, 128], strides = [1, 1]} : vector<8x384xf32> to vector<8x128xf32>
    %66 = arith.addf %64, %65 : vector<8x128xf32>
    %67 = arith.negf %66 : vector<8x128xf32>
    %68 = math.exp %67 : vector<8x128xf32>
    %cst_28 = arith.constant 1.000000e+00 : f32
    %69 = vector.broadcast %cst_28 : f32 to vector<8x128xf32>
    %70 = arith.addf %69, %68 : vector<8x128xf32>
    %71 = arith.divf %69, %70 : vector<8x128xf32>
    %72 = vector.extract_strided_slice %53 {offsets = [0, 256], sizes = [8, 128], strides = [1, 1]} : vector<8x384xf32> to vector<8x128xf32>
    %73 = vector.extract_strided_slice %55 {offsets = [0, 256], sizes = [8, 128], strides = [1, 1]} : vector<8x384xf32> to vector<8x128xf32>
    %74 = arith.addf %73, %15 : vector<8x128xf32>
    %75 = arith.mulf %63, %74 : vector<8x128xf32>
    %76 = arith.addf %72, %75 : vector<8x128xf32>
    %77 = math.tanh %76 : vector<8x128xf32>
    %78 = arith.subf %46, %77 : vector<8x128xf32>
    %79 = arith.mulf %71, %78 : vector<8x128xf32>
    %80 = arith.addf %77, %79 : vector<8x128xf32>
    %81 = arith.index_cast %c1_i32 : i32 to index
    %c0_29 = arith.constant 0 : index
    %c0_30 = arith.constant 0 : index
    %82 = vector.load %arg8[%81, %c0_29, %c0_30] : memref<8x8x128xf32, #tpu.memory_space<vmem>>, vector<1x8x128xf32>
    %83 = vector.shape_cast %82 : vector<1x8x128xf32> to vector<8x128xf32>
    %84 = vector.shape_cast %80 : vector<8x128xf32> to vector<1x8x128xf32>
    tpu.vector_store %arg8[%81, %c0_29, %c0_30], %84 {strides = array<i32>} : memref<8x8x128xf32, #tpu.memory_space<vmem>>, vector<1x8x128xf32>,
    %c2_i32 = arith.constant 2 : i32
    %85 = arith.index_cast %c2_i32 : i32 to index
    %c0_31 = arith.constant 0 : index
    %c0_32 = arith.constant 0 : index
    %86 = vector.load %arg10[%85, %c0_31, %c0_32] : memref<8x8x384xf32, #tpu.memory_space<vmem>>, vector<1x8x384xf32>
    %87 = vector.shape_cast %86 : vector<1x8x384xf32> to vector<8x384xf32>
    %88 = arith.truncf %80 : vector<8x128xf32> to vector<8x128xbf16>
    %cst_33 = arith.constant dense<0.000000e+00> : vector<8x384xf32>
    %89 = tpu.matmul %88, %12, %cst_33 {dimension_numbers = #tpu.dot_dimension_numbers<[1], [0], [0], [1], [0, 0, 1, 1], [], []>} : vector<8x128xbf16>, vector<128x384xbf16>, vector<8x384xf32> -> vector<8x384xf32>
    %90 = vector.extract_strided_slice %87 {offsets = [0, 0], sizes = [8, 128], strides = [1, 1]} : vector<8x384xf32> to vector<8x128xf32>
    %91 = vector.extract_strided_slice %89 {offsets = [0, 0], sizes = [8, 128], strides = [1, 1]} : vector<8x384xf32> to vector<8x128xf32>
    %92 = arith.addf %90, %91 : vector<8x128xf32>
    %93 = arith.negf %92 : vector<8x128xf32>
    %94 = math.exp %93 : vector<8x128xf32>
    %cst_34 = arith.constant 1.000000e+00 : f32
    %95 = vector.broadcast %cst_34 : f32 to vector<8x128xf32>
    %96 = arith.addf %95, %94 : vector<8x128xf32>
    %97 = arith.divf %95, %96 : vector<8x128xf32>
    %98 = vector.extract_strided_slice %87 {offsets = [0, 128], sizes = [8, 128], strides = [1, 1]} : vector<8x384xf32> to vector<8x128xf32>
    %99 = vector.extract_strided_slice %89 {offsets = [0, 128], sizes = [8, 128], strides = [1, 1]} : vector<8x384xf32> to vector<8x128xf32>
    %100 = arith.addf %98, %99 : vector<8x128xf32>
    %101 = arith.negf %100 : vector<8x128xf32>
    %102 = math.exp %101 : vector<8x128xf32>
    %cst_35 = arith.constant 1.000000e+00 : f32
    %103 = vector.broadcast %cst_35 : f32 to vector<8x128xf32>
    %104 = arith.addf %103, %102 : vector<8x128xf32>
    %105 = arith.divf %103, %104 : vector<8x128xf32>
    %106 = vector.extract_strided_slice %87 {offsets = [0, 256], sizes = [8, 128], strides = [1, 1]} : vector<8x384xf32> to vector<8x128xf32>
    %107 = vector.extract_strided_slice %89 {offsets = [0, 256], sizes = [8, 128], strides = [1, 1]} : vector<8x384xf32> to vector<8x128xf32>
    %108 = arith.addf %107, %15 : vector<8x128xf32>
    %109 = arith.mulf %97, %108 : vector<8x128xf32>
    %110 = arith.addf %106, %109 : vector<8x128xf32>
    %111 = math.tanh %110 : vector<8x128xf32>
    %112 = arith.subf %80, %111 : vector<8x128xf32>
    %113 = arith.mulf %105, %112 : vector<8x128xf32>
    %114 = arith.addf %111, %113 : vector<8x128xf32>
    %115 = arith.index_cast %c2_i32 : i32 to index
    %c0_36 = arith.constant 0 : index
    %c0_37 = arith.constant 0 : index
    %116 = vector.load %arg8[%115, %c0_36, %c0_37] : memref<8x8x128xf32, #tpu.memory_space<vmem>>, vector<1x8x128xf32>
    %117 = vector.shape_cast %116 : vector<1x8x128xf32> to vector<8x128xf32>
    %118 = vector.shape_cast %114 : vector<8x128xf32> to vector<1x8x128xf32>
    tpu.vector_store %arg8[%115, %c0_36, %c0_37], %118 {strides = array<i32>} : memref<8x8x128xf32, #tpu.memory_space<vmem>>, vector<1x8x128xf32>,
    %c3_i32 = arith.constant 3 : i32
    %119 = arith.index_cast %c3_i32 : i32 to index
    %c0_38 = arith.constant 0 : index
    %c0_39 = arith.constant 0 : index
    %120 = vector.load %arg10[%119, %c0_38, %c0_39] : memref<8x8x384xf32, #tpu.memory_space<vmem>>, vector<1x8x384xf32>
    %121 = vector.shape_cast %120 : vector<1x8x384xf32> to vector<8x384xf32>
    %122 = arith.truncf %114 : vector<8x128xf32> to vector<8x128xbf16>
    %cst_40 = arith.constant dense<0.000000e+00> : vector<8x384xf32>
    %123 = tpu.matmul %122, %12, %cst_40 {dimension_numbers = #tpu.dot_dimension_numbers<[1], [0], [0], [1], [0, 0, 1, 1], [], []>} : vector<8x128xbf16>, vector<128x384xbf16>, vector<8x384xf32> -> vector<8x384xf32>
    %124 = vector.extract_strided_slice %121 {offsets = [0, 0], sizes = [8, 128], strides = [1, 1]} : vector<8x384xf32> to vector<8x128xf32>
    %125 = vector.extract_strided_slice %123 {offsets = [0, 0], sizes = [8, 128], strides = [1, 1]} : vector<8x384xf32> to vector<8x128xf32>
    %126 = arith.addf %124, %125 : vector<8x128xf32>
    %127 = arith.negf %126 : vector<8x128xf32>
    %128 = math.exp %127 : vector<8x128xf32>
    %cst_41 = arith.constant 1.000000e+00 : f32
    %129 = vector.broadcast %cst_41 : f32 to vector<8x128xf32>
    %130 = arith.addf %129, %128 : vector<8x128xf32>
    %131 = arith.divf %129, %130 : vector<8x128xf32>
    %132 = vector.extract_strided_slice %121 {offsets = [0, 128], sizes = [8, 128], strides = [1, 1]} : vector<8x384xf32> to vector<8x128xf32>
    %133 = vector.extract_strided_slice %123 {offsets = [0, 128], sizes = [8, 128], strides = [1, 1]} : vector<8x384xf32> to vector<8x128xf32>
    %134 = arith.addf %132, %133 : vector<8x128xf32>
    %135 = arith.negf %134 : vector<8x128xf32>
    %136 = math.exp %135 : vector<8x128xf32>
    %cst_42 = arith.constant 1.000000e+00 : f32
    %137 = vector.broadcast %cst_42 : f32 to vector<8x128xf32>
    %138 = arith.addf %137, %136 : vector<8x128xf32>
    %139 = arith.divf %137, %138 : vector<8x128xf32>
    %140 = vector.extract_strided_slice %121 {offsets = [0, 256], sizes = [8, 128], strides = [1, 1]} : vector<8x384xf32> to vector<8x128xf32>
    %141 = vector.extract_strided_slice %123 {offsets = [0, 256], sizes = [8, 128], strides = [1, 1]} : vector<8x384xf32> to vector<8x128xf32>
    %142 = arith.addf %141, %15 : vector<8x128xf32>
    %143 = arith.mulf %131, %142 : vector<8x128xf32>
    %144 = arith.addf %140, %143 : vector<8x128xf32>
    %145 = math.tanh %144 : vector<8x128xf32>
    %146 = arith.subf %114, %145 : vector<8x128xf32>
    %147 = arith.mulf %139, %146 : vector<8x128xf32>
    %148 = arith.addf %145, %147 : vector<8x128xf32>
    %149 = arith.index_cast %c3_i32 : i32 to index
    %c0_43 = arith.constant 0 : index
    %c0_44 = arith.constant 0 : index
    %150 = vector.load %arg8[%149, %c0_43, %c0_44] : memref<8x8x128xf32, #tpu.memory_space<vmem>>, vector<1x8x128xf32>
    %151 = vector.shape_cast %150 : vector<1x8x128xf32> to vector<8x128xf32>
    %152 = vector.shape_cast %148 : vector<8x128xf32> to vector<1x8x128xf32>
    tpu.vector_store %arg8[%149, %c0_43, %c0_44], %152 {strides = array<i32>} : memref<8x8x128xf32, #tpu.memory_space<vmem>>, vector<1x8x128xf32>,
    %c4_i32 = arith.constant 4 : i32
    %153 = arith.index_cast %c4_i32 : i32 to index
    %c0_45 = arith.constant 0 : index
    %c0_46 = arith.constant 0 : index
    %154 = vector.load %arg10[%153, %c0_45, %c0_46] : memref<8x8x384xf32, #tpu.memory_space<vmem>>, vector<1x8x384xf32>
    %155 = vector.shape_cast %154 : vector<1x8x384xf32> to vector<8x384xf32>
    %156 = arith.truncf %148 : vector<8x128xf32> to vector<8x128xbf16>
    %cst_47 = arith.constant dense<0.000000e+00> : vector<8x384xf32>
    %157 = tpu.matmul %156, %12, %cst_47 {dimension_numbers = #tpu.dot_dimension_numbers<[1], [0], [0], [1], [0, 0, 1, 1], [], []>} : vector<8x128xbf16>, vector<128x384xbf16>, vector<8x384xf32> -> vector<8x384xf32>
    %158 = vector.extract_strided_slice %155 {offsets = [0, 0], sizes = [8, 128], strides = [1, 1]} : vector<8x384xf32> to vector<8x128xf32>
    %159 = vector.extract_strided_slice %157 {offsets = [0, 0], sizes = [8, 128], strides = [1, 1]} : vector<8x384xf32> to vector<8x128xf32>
    %160 = arith.addf %158, %159 : vector<8x128xf32>
    %161 = arith.negf %160 : vector<8x128xf32>
    %162 = math.exp %161 : vector<8x128xf32>
    %cst_48 = arith.constant 1.000000e+00 : f32
    %163 = vector.broadcast %cst_48 : f32 to vector<8x128xf32>
    %164 = arith.addf %163, %162 : vector<8x128xf32>
    %165 = arith.divf %163, %164 : vector<8x128xf32>
    %166 = vector.extract_strided_slice %155 {offsets = [0, 128], sizes = [8, 128], strides = [1, 1]} : vector<8x384xf32> to vector<8x128xf32>
    %167 = vector.extract_strided_slice %157 {offsets = [0, 128], sizes = [8, 128], strides = [1, 1]} : vector<8x384xf32> to vector<8x128xf32>
    %168 = arith.addf %166, %167 : vector<8x128xf32>
    %169 = arith.negf %168 : vector<8x128xf32>
    %170 = math.exp %169 : vector<8x128xf32>
    %cst_49 = arith.constant 1.000000e+00 : f32
    %171 = vector.broadcast %cst_49 : f32 to vector<8x128xf32>
    %172 = arith.addf %171, %170 : vector<8x128xf32>
    %173 = arith.divf %171, %172 : vector<8x128xf32>
    %174 = vector.extract_strided_slice %155 {offsets = [0, 256], sizes = [8, 128], strides = [1, 1]} : vector<8x384xf32> to vector<8x128xf32>
    %175 = vector.extract_strided_slice %157 {offsets = [0, 256], sizes = [8, 128], strides = [1, 1]} : vector<8x384xf32> to vector<8x128xf32>
    %176 = arith.addf %175, %15 : vector<8x128xf32>
    %177 = arith.mulf %165, %176 : vector<8x128xf32>
    %178 = arith.addf %174, %177 : vector<8x128xf32>
    %179 = math.tanh %178 : vector<8x128xf32>
    %180 = arith.subf %148, %179 : vector<8x128xf32>
    %181 = arith.mulf %173, %180 : vector<8x128xf32>
    %182 = arith.addf %179, %181 : vector<8x128xf32>
    %183 = arith.index_cast %c4_i32 : i32 to index
    %c0_50 = arith.constant 0 : index
    %c0_51 = arith.constant 0 : index
    %184 = vector.load %arg8[%183, %c0_50, %c0_51] : memref<8x8x128xf32, #tpu.memory_space<vmem>>, vector<1x8x128xf32>
    %185 = vector.shape_cast %184 : vector<1x8x128xf32> to vector<8x128xf32>
    %186 = vector.shape_cast %182 : vector<8x128xf32> to vector<1x8x128xf32>
    tpu.vector_store %arg8[%183, %c0_50, %c0_51], %186 {strides = array<i32>} : memref<8x8x128xf32, #tpu.memory_space<vmem>>, vector<1x8x128xf32>,
    %c5_i32 = arith.constant 5 : i32
    %187 = arith.index_cast %c5_i32 : i32 to index
    %c0_52 = arith.constant 0 : index
    %c0_53 = arith.constant 0 : index
    %188 = vector.load %arg10[%187, %c0_52, %c0_53] : memref<8x8x384xf32, #tpu.memory_space<vmem>>, vector<1x8x384xf32>
    %189 = vector.shape_cast %188 : vector<1x8x384xf32> to vector<8x384xf32>
    %190 = arith.truncf %182 : vector<8x128xf32> to vector<8x128xbf16>
    %cst_54 = arith.constant dense<0.000000e+00> : vector<8x384xf32>
    %191 = tpu.matmul %190, %12, %cst_54 {dimension_numbers = #tpu.dot_dimension_numbers<[1], [0], [0], [1], [0, 0, 1, 1], [], []>} : vector<8x128xbf16>, vector<128x384xbf16>, vector<8x384xf32> -> vector<8x384xf32>
    %192 = vector.extract_strided_slice %189 {offsets = [0, 0], sizes = [8, 128], strides = [1, 1]} : vector<8x384xf32> to vector<8x128xf32>
    %193 = vector.extract_strided_slice %191 {offsets = [0, 0], sizes = [8, 128], strides = [1, 1]} : vector<8x384xf32> to vector<8x128xf32>
    %194 = arith.addf %192, %193 : vector<8x128xf32>
    %195 = arith.negf %194 : vector<8x128xf32>
    %196 = math.exp %195 : vector<8x128xf32>
    %cst_55 = arith.constant 1.000000e+00 : f32
    %197 = vector.broadcast %cst_55 : f32 to vector<8x128xf32>
    %198 = arith.addf %197, %196 : vector<8x128xf32>
    %199 = arith.divf %197, %198 : vector<8x128xf32>
    %200 = vector.extract_strided_slice %189 {offsets = [0, 128], sizes = [8, 128], strides = [1, 1]} : vector<8x384xf32> to vector<8x128xf32>
    %201 = vector.extract_strided_slice %191 {offsets = [0, 128], sizes = [8, 128], strides = [1, 1]} : vector<8x384xf32> to vector<8x128xf32>
    %202 = arith.addf %200, %201 : vector<8x128xf32>
    %203 = arith.negf %202 : vector<8x128xf32>
    %204 = math.exp %203 : vector<8x128xf32>
    %cst_56 = arith.constant 1.000000e+00 : f32
    %205 = vector.broadcast %cst_56 : f32 to vector<8x128xf32>
    %206 = arith.addf %205, %204 : vector<8x128xf32>
    %207 = arith.divf %205, %206 : vector<8x128xf32>
    %208 = vector.extract_strided_slice %189 {offsets = [0, 256], sizes = [8, 128], strides = [1, 1]} : vector<8x384xf32> to vector<8x128xf32>
    %209 = vector.extract_strided_slice %191 {offsets = [0, 256], sizes = [8, 128], strides = [1, 1]} : vector<8x384xf32> to vector<8x128xf32>
    %210 = arith.addf %209, %15 : vector<8x128xf32>
    %211 = arith.mulf %199, %210 : vector<8x128xf32>
    %212 = arith.addf %208, %211 : vector<8x128xf32>
    %213 = math.tanh %212 : vector<8x128xf32>
    %214 = arith.subf %182, %213 : vector<8x128xf32>
    %215 = arith.mulf %207, %214 : vector<8x128xf32>
    %216 = arith.addf %213, %215 : vector<8x128xf32>
    %217 = arith.index_cast %c5_i32 : i32 to index
    %c0_57 = arith.constant 0 : index
    %c0_58 = arith.constant 0 : index
    %218 = vector.load %arg8[%217, %c0_57, %c0_58] : memref<8x8x128xf32, #tpu.memory_space<vmem>>, vector<1x8x128xf32>
    %219 = vector.shape_cast %218 : vector<1x8x128xf32> to vector<8x128xf32>
    %220 = vector.shape_cast %216 : vector<8x128xf32> to vector<1x8x128xf32>
    tpu.vector_store %arg8[%217, %c0_57, %c0_58], %220 {strides = array<i32>} : memref<8x8x128xf32, #tpu.memory_space<vmem>>, vector<1x8x128xf32>,
    %c6_i32 = arith.constant 6 : i32
    %221 = arith.index_cast %c6_i32 : i32 to index
    %c0_59 = arith.constant 0 : index
    %c0_60 = arith.constant 0 : index
    %222 = vector.load %arg10[%221, %c0_59, %c0_60] : memref<8x8x384xf32, #tpu.memory_space<vmem>>, vector<1x8x384xf32>
    %223 = vector.shape_cast %222 : vector<1x8x384xf32> to vector<8x384xf32>
    %224 = arith.truncf %216 : vector<8x128xf32> to vector<8x128xbf16>
    %cst_61 = arith.constant dense<0.000000e+00> : vector<8x384xf32>
    %225 = tpu.matmul %224, %12, %cst_61 {dimension_numbers = #tpu.dot_dimension_numbers<[1], [0], [0], [1], [0, 0, 1, 1], [], []>} : vector<8x128xbf16>, vector<128x384xbf16>, vector<8x384xf32> -> vector<8x384xf32>
    %226 = vector.extract_strided_slice %223 {offsets = [0, 0], sizes = [8, 128], strides = [1, 1]} : vector<8x384xf32> to vector<8x128xf32>
    %227 = vector.extract_strided_slice %225 {offsets = [0, 0], sizes = [8, 128], strides = [1, 1]} : vector<8x384xf32> to vector<8x128xf32>
    %228 = arith.addf %226, %227 : vector<8x128xf32>
    %229 = arith.negf %228 : vector<8x128xf32>
    %230 = math.exp %229 : vector<8x128xf32>
    %cst_62 = arith.constant 1.000000e+00 : f32
    %231 = vector.broadcast %cst_62 : f32 to vector<8x128xf32>
    %232 = arith.addf %231, %230 : vector<8x128xf32>
    %233 = arith.divf %231, %232 : vector<8x128xf32>
    %234 = vector.extract_strided_slice %223 {offsets = [0, 128], sizes = [8, 128], strides = [1, 1]} : vector<8x384xf32> to vector<8x128xf32>
    %235 = vector.extract_strided_slice %225 {offsets = [0, 128], sizes = [8, 128], strides = [1, 1]} : vector<8x384xf32> to vector<8x128xf32>
    %236 = arith.addf %234, %235 : vector<8x128xf32>
    %237 = arith.negf %236 : vector<8x128xf32>
    %238 = math.exp %237 : vector<8x128xf32>
    %cst_63 = arith.constant 1.000000e+00 : f32
    %239 = vector.broadcast %cst_63 : f32 to vector<8x128xf32>
    %240 = arith.addf %239, %238 : vector<8x128xf32>
    %241 = arith.divf %239, %240 : vector<8x128xf32>
    %242 = vector.extract_strided_slice %223 {offsets = [0, 256], sizes = [8, 128], strides = [1, 1]} : vector<8x384xf32> to vector<8x128xf32>
    %243 = vector.extract_strided_slice %225 {offsets = [0, 256], sizes = [8, 128], strides = [1, 1]} : vector<8x384xf32> to vector<8x128xf32>
    %244 = arith.addf %243, %15 : vector<8x128xf32>
    %245 = arith.mulf %233, %244 : vector<8x128xf32>
    %246 = arith.addf %242, %245 : vector<8x128xf32>
    %247 = math.tanh %246 : vector<8x128xf32>
    %248 = arith.subf %216, %247 : vector<8x128xf32>
    %249 = arith.mulf %241, %248 : vector<8x128xf32>
    %250 = arith.addf %247, %249 : vector<8x128xf32>
    %251 = arith.index_cast %c6_i32 : i32 to index
    %c0_64 = arith.constant 0 : index
    %c0_65 = arith.constant 0 : index
    %252 = vector.load %arg8[%251, %c0_64, %c0_65] : memref<8x8x128xf32, #tpu.memory_space<vmem>>, vector<1x8x128xf32>
    %253 = vector.shape_cast %252 : vector<1x8x128xf32> to vector<8x128xf32>
    %254 = vector.shape_cast %250 : vector<8x128xf32> to vector<1x8x128xf32>
    tpu.vector_store %arg8[%251, %c0_64, %c0_65], %254 {strides = array<i32>} : memref<8x8x128xf32, #tpu.memory_space<vmem>>, vector<1x8x128xf32>,
    %c7_i32 = arith.constant 7 : i32
    %255 = arith.index_cast %c7_i32 : i32 to index
    %c0_66 = arith.constant 0 : index
    %c0_67 = arith.constant 0 : index
    %256 = vector.load %arg10[%255, %c0_66, %c0_67] : memref<8x8x384xf32, #tpu.memory_space<vmem>>, vector<1x8x384xf32>
    %257 = vector.shape_cast %256 : vector<1x8x384xf32> to vector<8x384xf32>
    %258 = arith.truncf %250 : vector<8x128xf32> to vector<8x128xbf16>
    %cst_68 = arith.constant dense<0.000000e+00> : vector<8x384xf32>
    %259 = tpu.matmul %258, %12, %cst_68 {dimension_numbers = #tpu.dot_dimension_numbers<[1], [0], [0], [1], [0, 0, 1, 1], [], []>} : vector<8x128xbf16>, vector<128x384xbf16>, vector<8x384xf32> -> vector<8x384xf32>
    %260 = vector.extract_strided_slice %257 {offsets = [0, 0], sizes = [8, 128], strides = [1, 1]} : vector<8x384xf32> to vector<8x128xf32>
    %261 = vector.extract_strided_slice %259 {offsets = [0, 0], sizes = [8, 128], strides = [1, 1]} : vector<8x384xf32> to vector<8x128xf32>
    %262 = arith.addf %260, %261 : vector<8x128xf32>
    %263 = arith.negf %262 : vector<8x128xf32>
    %264 = math.exp %263 : vector<8x128xf32>
    %cst_69 = arith.constant 1.000000e+00 : f32
    %265 = vector.broadcast %cst_69 : f32 to vector<8x128xf32>
    %266 = arith.addf %265, %264 : vector<8x128xf32>
    %267 = arith.divf %265, %266 : vector<8x128xf32>
    %268 = vector.extract_strided_slice %257 {offsets = [0, 128], sizes = [8, 128], strides = [1, 1]} : vector<8x384xf32> to vector<8x128xf32>
    %269 = vector.extract_strided_slice %259 {offsets = [0, 128], sizes = [8, 128], strides = [1, 1]} : vector<8x384xf32> to vector<8x128xf32>
    %270 = arith.addf %268, %269 : vector<8x128xf32>
    %271 = arith.negf %270 : vector<8x128xf32>
    %272 = math.exp %271 : vector<8x128xf32>
    %cst_70 = arith.constant 1.000000e+00 : f32
    %273 = vector.broadcast %cst_70 : f32 to vector<8x128xf32>
    %274 = arith.addf %273, %272 : vector<8x128xf32>
    %275 = arith.divf %273, %274 : vector<8x128xf32>
    %276 = vector.extract_strided_slice %257 {offsets = [0, 256], sizes = [8, 128], strides = [1, 1]} : vector<8x384xf32> to vector<8x128xf32>
    %277 = vector.extract_strided_slice %259 {offsets = [0, 256], sizes = [8, 128], strides = [1, 1]} : vector<8x384xf32> to vector<8x128xf32>
    %278 = arith.addf %277, %15 : vector<8x128xf32>
    %279 = arith.mulf %267, %278 : vector<8x128xf32>
    %280 = arith.addf %276, %279 : vector<8x128xf32>
    %281 = math.tanh %280 : vector<8x128xf32>
    %282 = arith.subf %250, %281 : vector<8x128xf32>
    %283 = arith.mulf %275, %282 : vector<8x128xf32>
    %284 = arith.addf %281, %283 : vector<8x128xf32>
    %285 = arith.index_cast %c7_i32 : i32 to index
    %c0_71 = arith.constant 0 : index
    %c0_72 = arith.constant 0 : index
    %286 = vector.load %arg8[%285, %c0_71, %c0_72] : memref<8x8x128xf32, #tpu.memory_space<vmem>>, vector<1x8x128xf32>
    %287 = vector.shape_cast %286 : vector<1x8x128xf32> to vector<8x128xf32>
    %288 = vector.shape_cast %284 : vector<8x128xf32> to vector<1x8x128xf32>
    tpu.vector_store %arg8[%285, %c0_71, %c0_72], %288 {strides = array<i32>} : memref<8x8x128xf32, #tpu.memory_space<vmem>>, vector<1x8x128xf32>,
    %c8_i32 = arith.constant 8 : i32
    %c0_73 = arith.constant 0 : index
    %c0_74 = arith.constant 0 : index
    %289 = vector.load %arg9[%c0_73, %c0_74] : memref<8x128xf32, #tpu.memory_space<vmem>>, vector<8x128xf32>
    tpu.vector_store %arg9[%c0_73, %c0_74], %284 {strides = array<i32>} : memref<8x128xf32, #tpu.memory_space<vmem>>, vector<8x128xf32>,
    return
  }
  func.func @transform_0(%arg0: i32, %arg1: i32) -> (i32, i32, i32) {
    %c0_i32 = arith.constant 0 : i32
    %c0_i32_0 = arith.constant 0 : i32
    return %arg1, %arg0, %c0_i32 : i32, i32, i32
  }
  func.func @transform_1(%arg0: i32, %arg1: i32) -> (i32, i32) {
    %c0_i32 = arith.constant 0 : i32
    %c0_i32_0 = arith.constant 0 : i32
    return %arg0, %c0_i32 : i32, i32
  }
  func.func @transform_2(%arg0: i32, %arg1: i32) -> (i32, i32) {
    %c0_i32 = arith.constant 0 : i32
    %c0_i32_0 = arith.constant 0 : i32
    %c0_i32_1 = arith.constant 0 : i32
    return %c0_i32, %c0_i32_0 : i32, i32
  }
  func.func @transform_3(%arg0: i32, %arg1: i32) -> (i32, i32) {
    %c0_i32 = arith.constant 0 : i32
    %c0_i32_0 = arith.constant 0 : i32
    %c0_i32_1 = arith.constant 0 : i32
    return %c0_i32, %c0_i32_0 : i32, i32
  }
  func.func @transform_4(%arg0: i32, %arg1: i32) -> (i32, i32) {
    %c0_i32 = arith.constant 0 : i32
    %c0_i32_0 = arith.constant 0 : i32
    %c0_i32_1 = arith.constant 0 : i32
    return %c0_i32, %c0_i32_0 : i32, i32
  }
  func.func @transform_5(%arg0: i32, %arg1: i32) -> (i32, i32) {
    %c0_i32 = arith.constant 0 : i32
    %c0_i32_0 = arith.constant 0 : i32
    %c0_i32_1 = arith.constant 0 : i32
    return %c0_i32, %c0_i32_0 : i32, i32
  }
  func.func @transform_6(%arg0: i32, %arg1: i32) -> (i32, i32, i32) {
    %c0_i32 = arith.constant 0 : i32
    %c0_i32_0 = arith.constant 0 : i32
    return %arg1, %arg0, %c0_i32 : i32, i32, i32
  }
  func.func @transform_7(%arg0: i32, %arg1: i32) -> (i32, i32) {
    %c0_i32 = arith.constant 0 : i32
    %c0_i32_0 = arith.constant 0 : i32
    return %arg0, %c0_i32 : i32, i32
  }
}

</mosaic_0001>

<llo_original>
// kernel: tpu_custom_call.1
$region0: #{tpu_custom_call.1}
  #allocation0 [shape = 'u32[]', space=smem, size = 0x4, offset = 0x4, fixed_abs, tag = 'smem constant byte address 0x4 - core index']
  #allocation1 [shape = 'u32[72,128]{1,0:T(1,128)}', space=vmem, size = 0x9000, scoped, tag = 'internal scratch']
  #allocation2 [shape = 'f32[8,8,384]{2,1,0:T(8,128)}', space=vmem, size = 0x18000, scoped, tag = 'scratch operand']
  %s0 = inlined_call_operand.hbm [shape: bf16[8,8,128], index: 0, kind: input, shape index: {}]
  %s1 = inlined_call_operand.hbm [shape: f32[8,128], index: 1, kind: input, shape index: {}]
  %s2 = inlined_call_operand.hbm [shape: bf16[128,384], index: 2, kind: input, shape index: {}]
  %s3 = inlined_call_operand.hbm [shape: bf16[128,384], index: 3, kind: input, shape index: {}]
  %s4 = inlined_call_operand.vmem [shape: f32[1,384], index: 4, kind: input, shape index: {}]
  %s5 = inlined_call_operand.vmem [shape: f32[1,128], index: 5, kind: input, shape index: {}]
  %s6 = inlined_call_operand.hbm [shape: f32[8,8,128], index: 6, kind: output, shape index: {0}]
  %s7 = inlined_call_operand.hbm [shape: f32[8,128], index: 7, kind: output, shape index: {1}]
  %8 = xla_tuple %s6, %s7
  %s9 = sld [smem:[#allocation0]]
  $region62: #{tpu_custom_call.1} parent=0
    _
  %s11 = ssub.s32 1, %s9
  %s12 = scalar_select 0, %s11, %s9
  $region1: #{tpu_custom_call.1} parent=0
    #allocation3 [shape = 'u8[16384]{0}', space=vmem, size = 0x4000, scoped, tag = 'input window, operand 0, single buffered']
    #allocation4 [shape = 's32[1]{0}', space=sflag, size = 0x4, scoped, tag = 'scoped memory for tpu_custom_call.1']
    #allocation5 [shape = 's32[1]{0}', space=sflag, size = 0x4, scoped, tag = 'scoped memory for tpu_custom_call.1']
    #allocation6 [shape = 'u8[4096]{0}', space=vmem, size = 0x1000, scoped, tag = 'input window, operand 1, single buffered']
    #allocation7 [shape = 's32[1]{0}', space=sflag, size = 0x4, scoped, tag = 'scoped memory for tpu_custom_call.1']
    #allocation8 [shape = 'u8[98304]{0}', space=vmem, size = 0x18000, scoped, tag = 'input window, operand 2, single buffered']
    #allocation9 [shape = 'u8[98304]{0}', space=vmem, size = 0x18000, scoped, tag = 'input window, operand 3, single buffered']
    #allocation10 [shape = 's32[1]{0}', space=sflag, size = 0x4, scoped, tag = 'scoped memory for tpu_custom_call.1']
    #allocation11 [shape = 'u8[32768]{0}', space=vmem, size = 0x8000, scoped, tag = 'output window, operand 0, single buffered']
    #allocation12 [shape = 'u8[4096]{0}', space=vmem, size = 0x1000, scoped, tag = 'output window, operand 1, single buffered']
    #allocation13 [shape = 's32[1]{0}', space=sflag, size = 0x4, scoped, tag = 'scoped memory for tpu_custom_call.1']
    %13 = vsyncpa [#allocation4], 0
    %14 = vsyncpa [#allocation7], 0
    %15 = vsyncpa [#allocation10], 0
    %16 = vsyncpa [#allocation5], 0
    %17 = vsyncpa [#allocation13], 0
    // Predicated region
    $region2: #{tpu_custom_call.1} parent=1 // pred_check
      _
    $region3: #{tpu_custom_call.1} parent=1 // pred_check_branch
      %19 = sbr.rel (0) target = $region5
    $region4: #{tpu_custom_call.1} parent=1 // pred_region
      %21 = vsyncadd [#allocation4], 0
      %s22 = sshll.u32 %s0, 4
      %s23 = int_to_ptr.hbm [resolvable:$true] %s22
      %s24 = sshll.u32 [#allocation3], 4
      %s25 = int_to_ptr.vmem [resolvable:$true] %s24
      %30 = dma.hbm_to_vmem [thread:$0]  %s23, 512, %s25, [#allocation4], 64, 64, 4
    $region5: #{tpu_custom_call.1} parent=1 // pred_fallthru
      _
    // Predicated region
    $region6: #{tpu_custom_call.1} parent=1 // pred_check
      _
    $region7: #{tpu_custom_call.1} parent=1 // pred_check_branch
      %32 = sbr.rel (0) target = $region9
    $region8: #{tpu_custom_call.1} parent=1 // pred_region
      %34 = vsyncadd [#allocation7], 0
      %s36 = sshll.u32 %s1, 4
      %s37 = int_to_ptr.hbm [resolvable:$true] %s36
      %s38 = sshll.u32 [#allocation6], 4
      %s39 = int_to_ptr.vmem [resolvable:$true] %s38
      %41 = dma.hbm_to_vmem [thread:$0]  %s37, 128, %s39, [#allocation7]
    $region9: #{tpu_custom_call.1} parent=1 // pred_fallthru
      _
    // Predicated region
    $region10: #{tpu_custom_call.1} parent=1 // pred_check
      _
    $region11: #{tpu_custom_call.1} parent=1 // pred_check_branch
      %43 = sbr.rel (0) target = $region13
    $region12: #{tpu_custom_call.1} parent=1 // pred_region
      %45 = vsyncadd [#allocation7], 0
      %s46 = sshll.u32 %s2, 4
      %s47 = int_to_ptr.hbm [resolvable:$true] %s46
      %s48 = sshll.u32 [#allocation8], 4
      %s49 = int_to_ptr.vmem [resolvable:$true] %s48
      %54 = dma.hbm_to_vmem [thread:$0]  %s47, 3072, %s49, [#allocation7], 192, 192, 12
    $region13: #{tpu_custom_call.1} parent=1 // pred_fallthru
      _
    // Predicated region
    $region14: #{tpu_custom_call.1} parent=1 // pred_check
      _
    $region15: #{tpu_custom_call.1} parent=1 // pred_check_branch
      %56 = sbr.rel (0) target = $region17
    $region16: #{tpu_custom_call.1} parent=1 // pred_region
      %58 = vsyncadd [#allocation10], 0
      %s59 = sshll.u32 %s3, 4
      %s60 = int_to_ptr.hbm [resolvable:$true] %s59
      %s61 = sshll.u32 [#allocation9], 4
      %s62 = int_to_ptr.vmem [resolvable:$true] %s61
      %67 = dma.hbm_to_vmem [thread:$0]  %s60, 3072, %s62, [#allocation10], 192, 192, 12
    $region17: #{tpu_custom_call.1} parent=1 // pred_fallthru
      _
    // Predicated region
    $region18: #{tpu_custom_call.1} parent=1 // pred_check
      _
    $region19: #{tpu_custom_call.1} parent=1 // pred_check_branch
      %69 = sbr.rel (0) target = $region21
    $region20: #{tpu_custom_call.1} parent=1 // pred_region
      _
    $region21: #{tpu_custom_call.1} parent=1 // pred_fallthru
      _
    // Predicated region
    $region22: #{tpu_custom_call.1} parent=1 // pred_check
      _
    $region23: #{tpu_custom_call.1} parent=1 // pred_check_branch
      %71 = sbr.rel (0) target = $region25
    $region24: #{tpu_custom_call.1} parent=1 // pred_region
      _
    $region25: #{tpu_custom_call.1} parent=1 // pred_fallthru
      _
    // Predicated region
    $region26: #{tpu_custom_call.1} parent=1 // pred_check
      _
    $region27: #{tpu_custom_call.1} parent=1 // pred_check_branch
      %73 = sbr.rel (0) target = $region29
    $region28: #{tpu_custom_call.1} parent=1 // pred_region
      %75 = dma.done [#allocation4], 512
    $region29: #{tpu_custom_call.1} parent=1 // pred_fallthru
      _
    // Predicated region
    $region30: #{tpu_custom_call.1} parent=1 // pred_check
      _
    $region31: #{tpu_custom_call.1} parent=1 // pred_check_branch
      %77 = sbr.rel (0) target = $region33
    $region32: #{tpu_custom_call.1} parent=1 // pred_region
      %79 = dma.done [#allocation7], 128
    $region33: #{tpu_custom_call.1} parent=1 // pred_fallthru
      _
    // Predicated region
    $region34: #{tpu_custom_call.1} parent=1 // pred_check
      _
    $region35: #{tpu_custom_call.1} parent=1 // pred_check_branch
      %81 = sbr.rel (0) target = $region37
    $region36: #{tpu_custom_call.1} parent=1 // pred_region
      %83 = dma.done [#allocation7], 3072
    $region37: #{tpu_custom_call.1} parent=1 // pred_fallthru
      _
    // Predicated region
    $region38: #{tpu_custom_call.1} parent=1 // pred_check
      _
    $region39: #{tpu_custom_call.1} parent=1 // pred_check_branch
      %85 = sbr.rel (0) target = $region41
    $region40: #{tpu_custom_call.1} parent=1 // pred_region
      %87 = dma.done [#allocation10], 3072
    $region41: #{tpu_custom_call.1} parent=1 // pred_fallthru
      _
    %p88 = scmp.eq.s32.totalorder 0, 0
    // Predicated region
    $region42: #{tpu_custom_call.1} parent=1 // pred_check
      %p89 = pneg %p88
    $region43: #{tpu_custom_call.1} parent=1 // pred_check_branch
      %91 = sbr.rel (%p89) target = $region45
    $region44: #{tpu_custom_call.1} parent=1 // pred_region
      %v92 = vld [vmem:[#allocation6] sm:$0xff]
      %93 = vst [vmem:[#allocation12] sm:$0xff] %v92
    $region45: #{tpu_custom_call.1} parent=1 // pred_fallthru
      _
    %v94 = vld [vmem:[#allocation3] sm:$0xf]
    %v95 = vld [vmem:[#allocation3 + $0x4] sm:$0xf]
    %v96 = vld [vmem:[#allocation3 + $0x8] sm:$0xf]
    %v97 = vld [vmem:[#allocation3 + $0xc] sm:$0xf]
    %v98 = vld [vmem:[#allocation3 + $0x10] sm:$0xf]
    %v99 = vld [vmem:[#allocation3 + $0x14] sm:$0xf]
    %v100 = vld [vmem:[#allocation3 + $0x18] sm:$0xf]
    %v101 = vld [vmem:[#allocation3 + $0x1c] sm:$0xf]
    %v102 = vld [vmem:[#allocation8] sm:$0xff]
    %v103 = vld [vmem:[#allocation8 + $0x8] sm:$0xf]
    %v104 = vld [vmem:[#allocation8 + $0xc] sm:$0xff]
    %v105 = vld [vmem:[#allocation8 + $0x14] sm:$0xf]
    %v106 = vld [vmem:[#allocation8 + $0x18] sm:$0xff]
    %v107 = vld [vmem:[#allocation8 + $0x20] sm:$0xf]
    %v108 = vld [vmem:[#allocation8 + $0x24] sm:$0xff]
    %v109 = vld [vmem:[#allocation8 + $0x2c] sm:$0xf]
    %v110 = vld [vmem:[#allocation8 + $0x30] sm:$0xff]
    %v111 = vld [vmem:[#allocation8 + $0x38] sm:$0xf]
    %v112 = vld [vmem:[#allocation8 + $0x3c] sm:$0xff]
    %v113 = vld [vmem:[#allocation8 + $0x44] sm:$0xf]
    %v114 = vld [vmem:[#allocation8 + $0x48] sm:$0xff]
    %v115 = vld [vmem:[#allocation8 + $0x50] sm:$0xf]
    %v116 = vld [vmem:[#allocation8 + $0x54] sm:$0xff]
    %v117 = vld [vmem:[#allocation8 + $0x5c] sm:$0xf]
    %v118 = vld [vmem:[#allocation8 + $0x60] sm:$0xff]
    %v119 = vld [vmem:[#allocation8 + $0x68] sm:$0xf]
    %v120 = vld [vmem:[#allocation8 + $0x6c] sm:$0xff]
    %v121 = vld [vmem:[#allocation8 + $0x74] sm:$0xf]
    %v122 = vld [vmem:[#allocation8 + $0x78] sm:$0xff]
    %v123 = vld [vmem:[#allocation8 + $0x80] sm:$0xf]
    %v124 = vld [vmem:[#allocation8 + $0x84] sm:$0xff]
    %v125 = vld [vmem:[#allocation8 + $0x8c] sm:$0xf]
    %v126 = vld [vmem:[#allocation8 + $0x90] sm:$0xff]
    %v127 = vld [vmem:[#allocation8 + $0x98] sm:$0xf]
    %v128 = vld [vmem:[#allocation8 + $0x9c] sm:$0xff]
    %v129 = vld [vmem:[#allocation8 + $0xa4] sm:$0xf]
    %v130 = vld [vmem:[#allocation8 + $0xa8] sm:$0xff]
    %v131 = vld [vmem:[#allocation8 + $0xb0] sm:$0xf]
    %v132 = vld [vmem:[#allocation8 + $0xb4] sm:$0xff]
    %v133 = vld [vmem:[#allocation8 + $0xbc] sm:$0xf]
    %v134 = vld [vmem:[%s4] sm:$0x7]
    %v136 = vperm.slane %v134, 0
    %v137 = vperm.slane %v134, 1
    %v138 = vperm.slane %v134, 2
    %v150 = vunpack.c.l.b16 %v94
    %v151 = vunpack.c.l.b16 %v95
    %v152 = vunpack.c.l.b16 %v96
    %v153 = vunpack.c.l.b16 %v97
    %v154 = vunpack.c.l.b16 %v98
    %v155 = vunpack.c.l.b16 %v99
    %v156 = vunpack.c.l.b16 %v100
    %v157 = vunpack.c.l.b16 %v101
    %v158 = vpack.c.b16 %v151, %v150
    %v159 = vpack.c.b16 %v153, %v152
    %v160 = vpack.c.b16 %v155, %v154
    %v161 = vpack.c.b16 %v157, %v156
    %v198 = vunpack.c.l.b16 %v102
    %v199 = vunpack.c.h.b16 %v102
    %v200 = vunpack.c.l.b16 %v103
    %v201 = vunpack.c.l.b16 %v104
    %v202 = vunpack.c.h.b16 %v104
    %v203 = vunpack.c.l.b16 %v105
    %v204 = vunpack.c.l.b16 %v106
    %v205 = vunpack.c.h.b16 %v106
    %v206 = vunpack.c.l.b16 %v107
    %v207 = vunpack.c.l.b16 %v108
    %v208 = vunpack.c.h.b16 %v108
    %v209 = vunpack.c.l.b16 %v109
    %v210 = vunpack.c.l.b16 %v110
    %v211 = vunpack.c.h.b16 %v110
    %v212 = vunpack.c.l.b16 %v111
    %v213 = vunpack.c.l.b16 %v112
    %v214 = vunpack.c.h.b16 %v112
    %v215 = vunpack.c.l.b16 %v113
    %v216 = vunpack.c.l.b16 %v114
    %v217 = vunpack.c.h.b16 %v114
    %v218 = vunpack.c.l.b16 %v115
    %v219 = vunpack.c.l.b16 %v116
    %v220 = vunpack.c.h.b16 %v116
    %v221 = vunpack.c.l.b16 %v117
    %v222 = vunpack.c.l.b16 %v118
    %v223 = vunpack.c.h.b16 %v118
    %v224 = vunpack.c.l.b16 %v119
    %v225 = vunpack.c.l.b16 %v120
    %v226 = vunpack.c.h.b16 %v120
    %v227 = vunpack.c.l.b16 %v121
    %v228 = vunpack.c.l.b16 %v122
    %v229 = vunpack.c.h.b16 %v122
    %v230 = vunpack.c.l.b16 %v123
    %v231 = vunpack.c.l.b16 %v124
    %v232 = vunpack.c.h.b16 %v124
    %v233 = vunpack.c.l.b16 %v125
    %v234 = vunpack.c.l.b16 %v126
    %v235 = vunpack.c.h.b16 %v126
    %v236 = vunpack.c.l.b16 %v127
    %v237 = vunpack.c.l.b16 %v128
    %v238 = vunpack.c.h.b16 %v128
    %v239 = vunpack.c.l.b16 %v129
    %v240 = vunpack.c.l.b16 %v130
    %v241 = vunpack.c.h.b16 %v130
    %v242 = vunpack.c.l.b16 %v131
    %v243 = vunpack.c.l.b16 %v132
    %v244 = vunpack.c.h.b16 %v132
    %v245 = vunpack.c.l.b16 %v133
    %v246 = vpack.c.b16 %v201, %v198
    %v247 = vpack.c.b16 %v202, %v199
    %v248 = vpack.c.b16 %v203, %v200
    %v249 = vpack.c.b16 %v207, %v204
    %v250 = vpack.c.b16 %v208, %v205
    %v251 = vpack.c.b16 %v209, %v206
    %v252 = vpack.c.b16 %v213, %v210
    %v253 = vpack.c.b16 %v214, %v211
    %v254 = vpack.c.b16 %v215, %v212
    %v255 = vpack.c.b16 %v219, %v216
    %v256 = vpack.c.b16 %v220, %v217
    %v257 = vpack.c.b16 %v221, %v218
    %v258 = vpack.c.b16 %v225, %v222
    %v259 = vpack.c.b16 %v226, %v223
    %v260 = vpack.c.b16 %v227, %v224
    %v261 = vpack.c.b16 %v231, %v228
    %v262 = vpack.c.b16 %v232, %v229
    %v263 = vpack.c.b16 %v233, %v230
    %v264 = vpack.c.b16 %v237, %v234
    %v265 = vpack.c.b16 %v238, %v235
    %v266 = vpack.c.b16 %v239, %v236
    %v267 = vpack.c.b16 %v243, %v240
    %v268 = vpack.c.b16 %v244, %v241
    %v269 = vpack.c.b16 %v245, %v242
    %294 = vmatpush.bf16.msra.mxu0 %v267
    %295 = vmatpush.bf16.msra.mxu0 %v264
    %296 = vmatpush.bf16.msra.mxu0 %v261
    %297 = vmatpush.bf16.msra.mxu0 %v258
    %298 = vmatpush.bf16.msra.mxu0 %v255
    %299 = vmatpush.bf16.msra.mxu0 %v252
    %300 = vmatpush.bf16.msra.mxu0 %v249
    %301 = vmatpush.bf16.msra.mxu0 %v246
    %302 = vmatmul.bf16.gmra.mxu0 %v158
    %v303 = vpop.f32.mrf.mxu0
    %v304 = vadd.f32 %v136, %v303
    %v305 = vpop.f32.mrf.mxu0
    %v306 = vadd.f32 %v136, %v305
    %307 = vmatmul.bf16.gmra.mxu0 %v159
    %v308 = vpop.f32.mrf.mxu0
    %v309 = vadd.f32 %v136, %v308
    %v310 = vpop.f32.mrf.mxu0
    %v311 = vadd.f32 %v136, %v310
    %312 = vmatmul.bf16.gmra.mxu0 %v160
    %v313 = vpop.f32.mrf.mxu0
    %v314 = vadd.f32 %v136, %v313
    %v315 = vpop.f32.mrf.mxu0
    %v316 = vadd.f32 %v136, %v315
    %317 = vmatmul.bf16.gmra.mxu0 %v161
    %v318 = vpop.f32.mrf.mxu0
    %v319 = vadd.f32 %v136, %v318
    %v320 = vpop.f32.mrf.mxu0
    %v321 = vadd.f32 %v136, %v320
    %322 = vdwg.mxu0
    %323 = vmatpush.bf16.msra.mxu0 %v268
    %324 = vmatpush.bf16.msra.mxu0 %v265
    %325 = vmatpush.bf16.msra.mxu0 %v262
    %326 = vmatpush.bf16.msra.mxu0 %v259
    %327 = vmatpush.bf16.msra.mxu0 %v256
    %328 = vmatpush.bf16.msra.mxu0 %v253
    %329 = vmatpush.bf16.msra.mxu0 %v250
    %330 = vmatpush.bf16.msra.mxu0 %v247
    %331 = vmatmul.bf16.gmra.mxu0 %v158
    %v332 = vpop.f32.mrf.mxu0
    %v333 = vadd.f32 %v137, %v332
    %v334 = vpop.f32.mrf.mxu0
    %v335 = vadd.f32 %v137, %v334
    %336 = vmatmul.bf16.gmra.mxu0 %v159
    %v337 = vpop.f32.mrf.mxu0
    %v338 = vadd.f32 %v137, %v337
    %v339 = vpop.f32.mrf.mxu0
    %v340 = vadd.f32 %v137, %v339
    %341 = vmatmul.bf16.gmra.mxu0 %v160
    %v342 = vpop.f32.mrf.mxu0
    %v343 = vadd.f32 %v137, %v342
    %v344 = vpop.f32.mrf.mxu0
    %v345 = vadd.f32 %v137, %v344
    %346 = vmatmul.bf16.gmra.mxu0 %v161
    %v347 = vpop.f32.mrf.mxu0
    %v348 = vadd.f32 %v137, %v347
    %v349 = vpop.f32.mrf.mxu0
    %v350 = vadd.f32 %v137, %v349
    %351 = vdwg.mxu0
    %352 = vmatpush.bf16.msra.mxu0 %v269
    %353 = vmatpush.bf16.msra.mxu0 %v266
    %354 = vmatpush.bf16.msra.mxu0 %v263
    %355 = vmatpush.bf16.msra.mxu0 %v260
    %356 = vmatpush.bf16.msra.mxu0 %v257
    %357 = vmatpush.bf16.msra.mxu0 %v254
    %358 = vmatpush.bf16.msra.mxu0 %v251
    %359 = vmatpush.bf16.msra.mxu0 %v248
    %360 = vmatmul.bf16.gmra.mxu0 %v158
    %v361 = vpop.f32.mrf.mxu0
    %v362 = vadd.f32 %v138, %v361
    %v363 = vpop.f32.mrf.mxu0
    %v364 = vadd.f32 %v138, %v363
    %365 = vmatmul.bf16.gmra.mxu0 %v159
    %v366 = vpop.f32.mrf.mxu0
    %v367 = vadd.f32 %v138, %v366
    %v368 = vpop.f32.mrf.mxu0
    %v369 = vadd.f32 %v138, %v368
    %370 = vmatmul.bf16.gmra.mxu0 %v160
    %v371 = vpop.f32.mrf.mxu0
    %v372 = vadd.f32 %v138, %v371
    %v373 = vpop.f32.mrf.mxu0
    %v374 = vadd.f32 %v138, %v373
    %375 = vmatmul.bf16.gmra.mxu0 %v161
    %v376 = vpop.f32.mrf.mxu0
    %v377 = vadd.f32 %v138, %v376
    %v378 = vpop.f32.mrf.mxu0
    %v379 = vadd.f32 %v138, %v378
    %380 = vdwg.mxu0
    %381 = vst [vmem:[#allocation2] sm:$0xff] %v304
    %382 = vst [vmem:[#allocation2 + $0x8] sm:$0xff] %v333
    %383 = vst [vmem:[#allocation2 + $0x10] sm:$0xff] %v362
    %384 = vst [vmem:[#allocation2 + $0x18] sm:$0xff] %v306
    %385 = vst [vmem:[#allocation2 + $0x20] sm:$0xff] %v335
    %386 = vst [vmem:[#allocation2 + $0x28] sm:$0xff] %v364
    %387 = vst [vmem:[#allocation2 + $0x30] sm:$0xff] %v309
    %388 = vst [vmem:[#allocation2 + $0x38] sm:$0xff] %v338
    %389 = vst [vmem:[#allocation2 + $0x40] sm:$0xff] %v367
    %390 = vst [vmem:[#allocation2 + $0x48] sm:$0xff] %v311
    %391 = vst [vmem:[#allocation2 + $0x50] sm:$0xff] %v340
    %392 = vst [vmem:[#allocation2 + $0x58] sm:$0xff] %v369
    %393 = vst [vmem:[#allocation2 + $0x60] sm:$0xff] %v314
    %394 = vst [vmem:[#allocation2 + $0x68] sm:$0xff] %v343
    %395 = vst [vmem:[#allocation2 + $0x70] sm:$0xff] %v372
    %396 = vst [vmem:[#allocation2 + $0x78] sm:$0xff] %v316
    %397 = vst [vmem:[#allocation2 + $0x80] sm:$0xff] %v345
    %398 = vst [vmem:[#allocation2 + $0x88] sm:$0xff] %v374
    %399 = vst [vmem:[#allocation2 + $0x90] sm:$0xff] %v319
    %400 = vst [vmem:[#allocation2 + $0x98] sm:$0xff] %v348
    %401 = vst [vmem:[#allocation2 + $0xa0] sm:$0xff] %v377
    %402 = vst [vmem:[#allocation2 + $0xa8] sm:$0xff] %v321
    %403 = vst [vmem:[#allocation2 + $0xb0] sm:$0xff] %v350
    %404 = vst [vmem:[#allocation2 + $0xb8] sm:$0xff] %v379
    %v405 = vld [vmem:[#allocation9] sm:$0xff]
    %v406 = vld [vmem:[#allocation9 + $0x8] sm:$0xf]
    %v407 = vld [vmem:[#allocation9 + $0xc] sm:$0xff]
    %v408 = vld [vmem:[#allocation9 + $0x14] sm:$0xf]
    %v409 = vld [vmem:[#allocation9 + $0x18] sm:$0xff]
    %v410 = vld [vmem:[#allocation9 + $0x20] sm:$0xf]
    %v411 = vld [vmem:[#allocation9 + $0x24] sm:$0xff]
    %v412 = vld [vmem:[#allocation9 + $0x2c] sm:$0xf]
    %v413 = vld [vmem:[#allocation9 + $0x30] sm:$0xff]
    %v414 = vld [vmem:[#allocation9 + $0x38] sm:$0xf]
    %v415 = vld [vmem:[#allocation9 + $0x3c] sm:$0xff]
    %v416 = vld [vmem:[#allocation9 + $0x44] sm:$0xf]
    %v417 = vld [vmem:[#allocation9 + $0x48] sm:$0xff]
    %v418 = vld [vmem:[#allocation9 + $0x50] sm:$0xf]
    %v419 = vld [vmem:[#allocation9 + $0x54] sm:$0xff]
    %v420 = vld [vmem:[#allocation9 + $0x5c] sm:$0xf]
    %v421 = vld [vmem:[#allocation9 + $0x60] sm:$0xff]
    %v422 = vld [vmem:[#allocation9 + $0x68] sm:$0xf]
    %v423 = vld [vmem:[#allocation9 + $0x6c] sm:$0xff]
    %v424 = vld [vmem:[#allocation9 + $0x74] sm:$0xf]
    %v425 = vld [vmem:[#allocation9 + $0x78] sm:$0xff]
    %v426 = vld [vmem:[#allocation9 + $0x80] sm:$0xf]
    %v427 = vld [vmem:[#allocation9 + $0x84] sm:$0xff]
    %v428 = vld [vmem:[#allocation9 + $0x8c] sm:$0xf]
    %v429 = vld [vmem:[#allocation9 + $0x90] sm:$0xff]
    %v430 = vld [vmem:[#allocation9 + $0x98] sm:$0xf]
    %v431 = vld [vmem:[#allocation9 + $0x9c] sm:$0xff]
    %v432 = vld [vmem:[#allocation9 + $0xa4] sm:$0xf]
    %v433 = vld [vmem:[#allocation9 + $0xa8] sm:$0xff]
    %v434 = vld [vmem:[#allocation9 + $0xb0] sm:$0xf]
    %v435 = vld [vmem:[#allocation9 + $0xb4] sm:$0xff]
    %v436 = vld [vmem:[#allocation9 + $0xbc] sm:$0xf]
    %v437 = vld [vmem:[%s5] sm:$0x1]
    %v439 = vperm.slane %v437, 0
    %v441 = vld [vmem:[#allocation12] sm:$0xff]
    %v442 = vld [vmem:[#allocation2] sm:$0xff]
    %v443 = vld [vmem:[#allocation2 + $0x8] sm:$0xff]
    %v444 = vld [vmem:[#allocation2 + $0x10] sm:$0xff]
    %v445 = vpack.c.bf16 %v441, %v441
    %v478 = vunpack.c.l.b16 %v405
    %v479 = vunpack.c.h.b16 %v405
    %v480 = vunpack.c.l.b16 %v406
    %v481 = vunpack.c.l.b16 %v407
    %v482 = vunpack.c.h.b16 %v407
    %v483 = vunpack.c.l.b16 %v408
    %v484 = vunpack.c.l.b16 %v409
    %v485 = vunpack.c.h.b16 %v409
    %v486 = vunpack.c.l.b16 %v410
    %v487 = vunpack.c.l.b16 %v411
    %v488 = vunpack.c.h.b16 %v411
    %v489 = vunpack.c.l.b16 %v412
    %v490 = vunpack.c.l.b16 %v413
    %v491 = vunpack.c.h.b16 %v413
    %v492 = vunpack.c.l.b16 %v414
    %v493 = vunpack.c.l.b16 %v415
    %v494 = vunpack.c.h.b16 %v415
    %v495 = vunpack.c.l.b16 %v416
    %v496 = vunpack.c.l.b16 %v417
    %v497 = vunpack.c.h.b16 %v417
    %v498 = vunpack.c.l.b16 %v418
    %v499 = vunpack.c.l.b16 %v419
    %v500 = vunpack.c.h.b16 %v419
    %v501 = vunpack.c.l.b16 %v420
    %v502 = vunpack.c.l.b16 %v421
    %v503 = vunpack.c.h.b16 %v421
    %v504 = vunpack.c.l.b16 %v422
    %v505 = vunpack.c.l.b16 %v423
    %v506 = vunpack.c.h.b16 %v423
    %v507 = vunpack.c.l.b16 %v424
    %v508 = vunpack.c.l.b16 %v425
    %v509 = vunpack.c.h.b16 %v425
    %v510 = vunpack.c.l.b16 %v426
    %v511 = vunpack.c.l.b16 %v427
    %v512 = vunpack.c.h.b16 %v427
    %v513 = vunpack.c.l.b16 %v428
    %v514 = vunpack.c.l.b16 %v429
    %v515 = vunpack.c.h.b16 %v429
    %v516 = vunpack.c.l.b16 %v430
    %v517 = vunpack.c.l.b16 %v431
    %v518 = vunpack.c.h.b16 %v431
    %v519 = vunpack.c.l.b16 %v432
    %v520 = vunpack.c.l.b16 %v433
    %v521 = vunpack.c.h.b16 %v433
    %v522 = vunpack.c.l.b16 %v434
    %v523 = vunpack.c.l.b16 %v435
    %v524 = vunpack.c.h.b16 %v435
    %v525 = vunpack.c.l.b16 %v436
    %v526 = vpack.c.b16 %v481, %v478
    %v527 = vpack.c.b16 %v482, %v479
    %v528 = vpack.c.b16 %v483, %v480
    %v529 = vpack.c.b16 %v487, %v484
    %v530 = vpack.c.b16 %v488, %v485
    %v531 = vpack.c.b16 %v489, %v486
    %v532 = vpack.c.b16 %v493, %v490
    %v533 = vpack.c.b16 %v494, %v491
    %v534 = vpack.c.b16 %v495, %v492
    %v535 = vpack.c.b16 %v499, %v496
    %v536 = vpack.c.b16 %v500, %v497
    %v537 = vpack.c.b16 %v501, %v498
    %v538 = vpack.c.b16 %v505, %v502
    %v539 = vpack.c.b16 %v506, %v503
    %v540 = vpack.c.b16 %v507, %v504
    %v541 = vpack.c.b16 %v511, %v508
    %v542 = vpack.c.b16 %v512, %v509
    %v543 = vpack.c.b16 %v513, %v510
    %v544 = vpack.c.b16 %v517, %v514
    %v545 = vpack.c.b16 %v518, %v515
    %v546 = vpack.c.b16 %v519, %v516
    %v547 = vpack.c.b16 %v523, %v520
    %v548 = vpack.c.b16 %v524, %v521
    %v549 = vpack.c.b16 %v525, %v522
    %574 = vmatpush.bf16.msra.mxu0 %v547
    %575 = vmatpush.bf16.msra.mxu0 %v544
    %576 = vmatpush.bf16.msra.mxu0 %v541
    %577 = vmatpush.bf16.msra.mxu0 %v538
    %578 = vmatpush.bf16.msra.mxu0 %v535
    %579 = vmatpush.bf16.msra.mxu0 %v532
    %580 = vmatpush.bf16.msra.mxu0 %v529
    %581 = vmatpush.bf16.msra.mxu0 %v526
    %582 = vmatmul.bf16.gmra.mxu0 %v445
    %v583 = vpop.f32.mrf.mxu0
    %v584 = vadd.f32 0.0, %v583
    %v585 = vpop.f32.mrf.mxu0
    %586 = vdwg.mxu0
    %587 = vmatpush.bf16.msra.mxu0 %v548
    %588 = vmatpush.bf16.msra.mxu0 %v545
    %589 = vmatpush.bf16.msra.mxu0 %v542
    %590 = vmatpush.bf16.msra.mxu0 %v539
    %591 = vmatpush.bf16.msra.mxu0 %v536
    %592 = vmatpush.bf16.msra.mxu0 %v533
    %593 = vmatpush.bf16.msra.mxu0 %v530
    %594 = vmatpush.bf16.msra.mxu0 %v527
    %595 = vmatmul.bf16.gmra.mxu0 %v445
    %v596 = vpop.f32.mrf.mxu0
    %v597 = vadd.f32 0.0, %v596
    %v598 = vpop.f32.mrf.mxu0
    %599 = vdwg.mxu0
    %600 = vmatpush.bf16.msra.mxu0 %v549
    %601 = vmatpush.bf16.msra.mxu0 %v546
    %602 = vmatpush.bf16.msra.mxu0 %v543
    %603 = vmatpush.bf16.msra.mxu0 %v540
    %604 = vmatpush.bf16.msra.mxu0 %v537
    %605 = vmatpush.bf16.msra.mxu0 %v534
    %606 = vmatpush.bf16.msra.mxu0 %v531
    %607 = vmatpush.bf16.msra.mxu0 %v528
    %608 = vmatmul.bf16.gmra.mxu0 %v445
    %v609 = vpop.f32.mrf.mxu0
    %v610 = vadd.f32 0.0, %v609
    %v611 = vpop.f32.mrf.mxu0
    %612 = vdwg.mxu0
    %v613 = vadd.f32 %v442, %v584
    %v614 = vxor.u32 %v613, 2147483648
    %v615 = vmul.f32 %v614, 1.442695
    %v616 = vpow.pop %v615
    %v617 = vadd.f32 %v616, 1.0
    %v618 = vrcp.pop %v617
    %v619 = vmul.f32 %v617, %v618
    %v620 = vsub.f32 1.0, %v619
    %v621 = vmul.f32 %v618, %v620
    %v622 = vadd.f32 %v618, %v621
    %vm623 = vweird.f32 %v617
    %vm624 = vweird.f32 %v618
    %vm625 = vmor %vm623, %vm624
    %v626 = vsel %vm625, %v618, %v622
    %v627 = vand.u32 2147483647, %v617
    %vm628 = vcmp.eq.f32.partialorder %v627, 8.507059e+37
    %v629 = vand.u32 %v617, 2147483648
    %v630 = vor.u32 1.1754944e-38, %v629
    %v631 = vsel %vm628, %v630, %v626
    %v632 = vmul.f32 1.0, %v631
    %v633 = vadd.f32 %v443, %v597
    %v634 = vxor.u32 %v633, 2147483648
    %v635 = vmul.f32 %v634, 1.442695
    %v636 = vpow.pop %v635
    %v637 = vadd.f32 %v636, 1.0
    %v638 = vrcp.pop %v637
    %v639 = vmul.f32 %v637, %v638
    %v640 = vsub.f32 1.0, %v639
    %v641 = vmul.f32 %v638, %v640
    %v642 = vadd.f32 %v638, %v641
    %vm643 = vweird.f32 %v637
    %vm644 = vweird.f32 %v638
    %vm645 = vmor %vm643, %vm644
    %v646 = vsel %vm645, %v638, %v642
    %v647 = vand.u32 2147483647, %v637
    %vm648 = vcmp.eq.f32.partialorder %v647, 8.507059e+37
    %v649 = vand.u32 %v637, 2147483648
    %v650 = vor.u32 1.1754944e-38, %v649
    %v651 = vsel %vm648, %v650, %v646
    %v652 = vmul.f32 1.0, %v651
    %v653 = vadd.f32 %v610, %v439
    %v654 = vmul.f32 %v632, %v653
    %v655 = vadd.f32 %v444, %v654
    %v656 = vtanh.pop %v655
    %v657 = vsub.f32 %v441, %v656
    %v658 = vmul.f32 %v652, %v657
    %v659 = vadd.f32 %v656, %v658
    %660 = vst [vmem:[#allocation11] sm:$0xff] %v659
    %s661 = scalar_lea.vmem [#allocation2], 24
    %v662 = vld [vmem:[%s661] sm:$0xff]
    %v663 = vld [vmem:[%s661 + $0x8] sm:$0xff]
    %v664 = vld [vmem:[%s661 + $0x10] sm:$0xff]
    %v665 = vpack.c.bf16 %v659, %v659
    %666 = vmatpush.bf16.msra.mxu0 %v547
    %667 = vmatpush.bf16.msra.mxu0 %v544
    %668 = vmatpush.bf16.msra.mxu0 %v541
    %669 = vmatpush.bf16.msra.mxu0 %v538
    %670 = vmatpush.bf16.msra.mxu0 %v535
    %671 = vmatpush.bf16.msra.mxu0 %v532
    %672 = vmatpush.bf16.msra.mxu0 %v529
    %673 = vmatpush.bf16.msra.mxu0 %v526
    %674 = vmatmul.bf16.gmra.mxu0 %v665
    %v675 = vpop.f32.mrf.mxu0
    %v676 = vadd.f32 0.0, %v675
    %v677 = vpop.f32.mrf.mxu0
    %678 = vdwg.mxu0
    %679 = vmatpush.bf16.msra.mxu0 %v548
    %680 = vmatpush.bf16.msra.mxu0 %v545
    %681 = vmatpush.bf16.msra.mxu0 %v542
    %682 = vmatpush.bf16.msra.mxu0 %v539
    %683 = vmatpush.bf16.msra.mxu0 %v536
    %684 = vmatpush.bf16.msra.mxu0 %v533
    %685 = vmatpush.bf16.msra.mxu0 %v530
    %686 = vmatpush.bf16.msra.mxu0 %v527
    %687 = vmatmul.bf16.gmra.mxu0 %v665
    %v688 = vpop.f32.mrf.mxu0
    %v689 = vadd.f32 0.0, %v688
    %v690 = vpop.f32.mrf.mxu0
    %691 = vdwg.mxu0
    %692 = vmatpush.bf16.msra.mxu0 %v549
    %693 = vmatpush.bf16.msra.mxu0 %v546
    %694 = vmatpush.bf16.msra.mxu0 %v543
    %695 = vmatpush.bf16.msra.mxu0 %v540
    %696 = vmatpush.bf16.msra.mxu0 %v537
    %697 = vmatpush.bf16.msra.mxu0 %v534
    %698 = vmatpush.bf16.msra.mxu0 %v531
    %699 = vmatpush.bf16.msra.mxu0 %v528
    %700 = vmatmul.bf16.gmra.mxu0 %v665
    %v701 = vpop.f32.mrf.mxu0
    %v702 = vadd.f32 0.0, %v701
    %v703 = vpop.f32.mrf.mxu0
    %704 = vdwg.mxu0
    %v705 = vadd.f32 %v662, %v676
    %v706 = vxor.u32 %v705, 2147483648
    %v707 = vmul.f32 %v706, 1.442695
    %v708 = vpow.pop %v707
    %v709 = vadd.f32 %v708, 1.0
    %v710 = vrcp.pop %v709
    %v711 = vmul.f32 %v709, %v710
    %v712 = vsub.f32 1.0, %v711
    %v713 = vmul.f32 %v710, %v712
    %v714 = vadd.f32 %v710, %v713
    %vm715 = vweird.f32 %v709
    %vm716 = vweird.f32 %v710
    %vm717 = vmor %vm715, %vm716
    %v718 = vsel %vm717, %v710, %v714
    %v719 = vand.u32 2147483647, %v709
    %vm720 = vcmp.eq.f32.partialorder %v719, 8.507059e+37
    %v721 = vand.u32 %v709, 2147483648
    %v722 = vor.u32 1.1754944e-38, %v721
    %v723 = vsel %vm720, %v722, %v718
    %v724 = vmul.f32 1.0, %v723
    %v725 = vadd.f32 %v663, %v689
    %v726 = vxor.u32 %v725, 2147483648
    %v727 = vmul.f32 %v726, 1.442695
    %v728 = vpow.pop %v727
    %v729 = vadd.f32 %v728, 1.0
    %v730 = vrcp.pop %v729
    %v731 = vmul.f32 %v729, %v730
    %v732 = vsub.f32 1.0, %v731
    %v733 = vmul.f32 %v730, %v732
    %v734 = vadd.f32 %v730, %v733
    %vm735 = vweird.f32 %v729
    %vm736 = vweird.f32 %v730
    %vm737 = vmor %vm735, %vm736
    %v738 = vsel %vm737, %v730, %v734
    %v739 = vand.u32 2147483647, %v729
    %vm740 = vcmp.eq.f32.partialorder %v739, 8.507059e+37
    %v741 = vand.u32 %v729, 2147483648
    %v742 = vor.u32 1.1754944e-38, %v741
    %v743 = vsel %vm740, %v742, %v738
    %v744 = vmul.f32 1.0, %v743
    %v745 = vadd.f32 %v702, %v439
    %v746 = vmul.f32 %v724, %v745
    %v747 = vadd.f32 %v664, %v746
    %v748 = vtanh.pop %v747
    %v749 = vsub.f32 %v659, %v748
    %v750 = vmul.f32 %v744, %v749
    %v751 = vadd.f32 %v748, %v750
    %s752 = scalar_lea.vmem [#allocation11], 8
    %753 = vst [vmem:[%s752] sm:$0xff] %v751
    %s754 = scalar_lea.vmem [#allocation2], 48
    %v755 = vld [vmem:[%s754] sm:$0xff]
    %v756 = vld [vmem:[%s754 + $0x8] sm:$0xff]
    %v757 = vld [vmem:[%s754 + $0x10] sm:$0xff]
    %v758 = vpack.c.bf16 %v751, %v751
    %759 = vmatpush.bf16.msra.mxu0 %v547
    %760 = vmatpush.bf16.msra.mxu0 %v544
    %761 = vmatpush.bf16.msra.mxu0 %v541
    %762 = vmatpush.bf16.msra.mxu0 %v538
    %763 = vmatpush.bf16.msra.mxu0 %v535
    %764 = vmatpush.bf16.msra.mxu0 %v532
    %765 = vmatpush.bf16.msra.mxu0 %v529
    %766 = vmatpush.bf16.msra.mxu0 %v526
    %767 = vmatmul.bf16.gmra.mxu0 %v758
    %v768 = vpop.f32.mrf.mxu0
    %v769 = vadd.f32 0.0, %v768
    %v770 = vpop.f32.mrf.mxu0
    %771 = vdwg.mxu0
    %772 = vmatpush.bf16.msra.mxu0 %v548
    %773 = vmatpush.bf16.msra.mxu0 %v545
    %774 = vmatpush.bf16.msra.mxu0 %v542
    %775 = vmatpush.bf16.msra.mxu0 %v539
    %776 = vmatpush.bf16.msra.mxu0 %v536
    %777 = vmatpush.bf16.msra.mxu0 %v533
    %778 = vmatpush.bf16.msra.mxu0 %v530
    %779 = vmatpush.bf16.msra.mxu0 %v527
    %780 = vmatmul.bf16.gmra.mxu0 %v758
    %v781 = vpop.f32.mrf.mxu0
    %v782 = vadd.f32 0.0, %v781
    %v783 = vpop.f32.mrf.mxu0
    %784 = vdwg.mxu0
    %785 = vmatpush.bf16.msra.mxu0 %v549
    %786 = vmatpush.bf16.msra.mxu0 %v546
    %787 = vmatpush.bf16.msra.mxu0 %v543
    %788 = vmatpush.bf16.msra.mxu0 %v540
    %789 = vmatpush.bf16.msra.mxu0 %v537
    %790 = vmatpush.bf16.msra.mxu0 %v534
    %791 = vmatpush.bf16.msra.mxu0 %v531
    %792 = vmatpush.bf16.msra.mxu0 %v528
    %793 = vmatmul.bf16.gmra.mxu0 %v758
    %v794 = vpop.f32.mrf.mxu0
    %v795 = vadd.f32 0.0, %v794
    %v796 = vpop.f32.mrf.mxu0
    %797 = vdwg.mxu0
    %v798 = vadd.f32 %v755, %v769
    %v799 = vxor.u32 %v798, 2147483648
    %v800 = vmul.f32 %v799, 1.442695
    %v801 = vpow.pop %v800
    %v802 = vadd.f32 %v801, 1.0
    %v803 = vrcp.pop %v802
    %v804 = vmul.f32 %v802, %v803
    %v805 = vsub.f32 1.0, %v804
    %v806 = vmul.f32 %v803, %v805
    %v807 = vadd.f32 %v803, %v806
    %vm808 = vweird.f32 %v802
    %vm809 = vweird.f32 %v803
    %vm810 = vmor %vm808, %vm809
    %v811 = vsel %vm810, %v803, %v807
    %v812 = vand.u32 2147483647, %v802
    %vm813 = vcmp.eq.f32.partialorder %v812, 8.507059e+37
    %v814 = vand.u32 %v802, 2147483648
    %v815 = vor.u32 1.1754944e-38, %v814
    %v816 = vsel %vm813, %v815, %v811
    %v817 = vmul.f32 1.0, %v816
    %v818 = vadd.f32 %v756, %v782
    %v819 = vxor.u32 %v818, 2147483648
    %v820 = vmul.f32 %v819, 1.442695
    %v821 = vpow.pop %v820
    %v822 = vadd.f32 %v821, 1.0
    %v823 = vrcp.pop %v822
    %v824 = vmul.f32 %v822, %v823
    %v825 = vsub.f32 1.0, %v824
    %v826 = vmul.f32 %v823, %v825
    %v827 = vadd.f32 %v823, %v826
    %vm828 = vweird.f32 %v822
    %vm829 = vweird.f32 %v823
    %vm830 = vmor %vm828, %vm829
    %v831 = vsel %vm830, %v823, %v827
    %v832 = vand.u32 2147483647, %v822
    %vm833 = vcmp.eq.f32.partialorder %v832, 8.507059e+37
    %v834 = vand.u32 %v822, 2147483648
    %v835 = vor.u32 1.1754944e-38, %v834
    %v836 = vsel %vm833, %v835, %v831
    %v837 = vmul.f32 1.0, %v836
    %v838 = vadd.f32 %v795, %v439
    %v839 = vmul.f32 %v817, %v838
    %v840 = vadd.f32 %v757, %v839
    %v841 = vtanh.pop %v840
    %v842 = vsub.f32 %v751, %v841
    %v843 = vmul.f32 %v837, %v842
    %v844 = vadd.f32 %v841, %v843
    %s845 = scalar_lea.vmem [#allocation11], 16
    %846 = vst [vmem:[%s845] sm:$0xff] %v844
    %s847 = scalar_lea.vmem [#allocation2], 72
    %v848 = vld [vmem:[%s847] sm:$0xff]
    %v849 = vld [vmem:[%s847 + $0x8] sm:$0xff]
    %v850 = vld [vmem:[%s847 + $0x10] sm:$0xff]
    %v851 = vpack.c.bf16 %v844, %v844
    %852 = vmatpush.bf16.msra.mxu0 %v547
    %853 = vmatpush.bf16.msra.mxu0 %v544
    %854 = vmatpush.bf16.msra.mxu0 %v541
    %855 = vmatpush.bf16.msra.mxu0 %v538
    %856 = vmatpush.bf16.msra.mxu0 %v535
    %857 = vmatpush.bf16.msra.mxu0 %v532
    %858 = vmatpush.bf16.msra.mxu0 %v529
    %859 = vmatpush.bf16.msra.mxu0 %v526
    %860 = vmatmul.bf16.gmra.mxu0 %v851
    %v861 = vpop.f32.mrf.mxu0
    %v862 = vadd.f32 0.0, %v861
    %v863 = vpop.f32.mrf.mxu0
    %864 = vdwg.mxu0
    %865 = vmatpush.bf16.msra.mxu0 %v548
    %866 = vmatpush.bf16.msra.mxu0 %v545
    %867 = vmatpush.bf16.msra.mxu0 %v542
    %868 = vmatpush.bf16.msra.mxu0 %v539
    %869 = vmatpush.bf16.msra.mxu0 %v536
    %870 = vmatpush.bf16.msra.mxu0 %v533
    %871 = vmatpush.bf16.msra.mxu0 %v530
    %872 = vmatpush.bf16.msra.mxu0 %v527
    %873 = vmatmul.bf16.gmra.mxu0 %v851
    %v874 = vpop.f32.mrf.mxu0
    %v875 = vadd.f32 0.0, %v874
    %v876 = vpop.f32.mrf.mxu0
    %877 = vdwg.mxu0
    %878 = vmatpush.bf16.msra.mxu0 %v549
    %879 = vmatpush.bf16.msra.mxu0 %v546
    %880 = vmatpush.bf16.msra.mxu0 %v543
    %881 = vmatpush.bf16.msra.mxu0 %v540
    %882 = vmatpush.bf16.msra.mxu0 %v537
    %883 = vmatpush.bf16.msra.mxu0 %v534
    %884 = vmatpush.bf16.msra.mxu0 %v531
    %885 = vmatpush.bf16.msra.mxu0 %v528
    %886 = vmatmul.bf16.gmra.mxu0 %v851
    %v887 = vpop.f32.mrf.mxu0
    %v888 = vadd.f32 0.0, %v887
    %v889 = vpop.f32.mrf.mxu0
    %890 = vdwg.mxu0
    %v891 = vadd.f32 %v848, %v862
    %v892 = vxor.u32 %v891, 2147483648
    %v893 = vmul.f32 %v892, 1.442695
    %v894 = vpow.pop %v893
    %v895 = vadd.f32 %v894, 1.0
    %v896 = vrcp.pop %v895
    %v897 = vmul.f32 %v895, %v896
    %v898 = vsub.f32 1.0, %v897
    %v899 = vmul.f32 %v896, %v898
    %v900 = vadd.f32 %v896, %v899
    %vm901 = vweird.f32 %v895
    %vm902 = vweird.f32 %v896
    %vm903 = vmor %vm901, %vm902
    %v904 = vsel %vm903, %v896, %v900
    %v905 = vand.u32 2147483647, %v895
    %vm906 = vcmp.eq.f32.partialorder %v905, 8.507059e+37
    %v907 = vand.u32 %v895, 2147483648
    %v908 = vor.u32 1.1754944e-38, %v907
    %v909 = vsel %vm906, %v908, %v904
    %v910 = vmul.f32 1.0, %v909
    %v911 = vadd.f32 %v849, %v875
    %v912 = vxor.u32 %v911, 2147483648
    %v913 = vmul.f32 %v912, 1.442695
    %v914 = vpow.pop %v913
    %v915 = vadd.f32 %v914, 1.0
    %v916 = vrcp.pop %v915
    %v917 = vmul.f32 %v915, %v916
    %v918 = vsub.f32 1.0, %v917
    %v919 = vmul.f32 %v916, %v918
    %v920 = vadd.f32 %v916, %v919
    %vm921 = vweird.f32 %v915
    %vm922 = vweird.f32 %v916
    %vm923 = vmor %vm921, %vm922
    %v924 = vsel %vm923, %v916, %v920
    %v925 = vand.u32 2147483647, %v915
    %vm926 = vcmp.eq.f32.partialorder %v925, 8.507059e+37
    %v927 = vand.u32 %v915, 2147483648
    %v928 = vor.u32 1.1754944e-38, %v927
    %v929 = vsel %vm926, %v928, %v924
    %v930 = vmul.f32 1.0, %v929
    %v931 = vadd.f32 %v888, %v439
    %v932 = vmul.f32 %v910, %v931
    %v933 = vadd.f32 %v850, %v932
    %v934 = vtanh.pop %v933
    %v935 = vsub.f32 %v844, %v934
    %v936 = vmul.f32 %v930, %v935
    %v937 = vadd.f32 %v934, %v936
    %s938 = scalar_lea.vmem [#allocation11], 24
    %939 = vst [vmem:[%s938] sm:$0xff] %v937
    %s940 = scalar_lea.vmem [#allocation2], 96
    %v941 = vld [vmem:[%s940] sm:$0xff]
    %v942 = vld [vmem:[%s940 + $0x8] sm:$0xff]
    %v943 = vld [vmem:[%s940 + $0x10] sm:$0xff]
    %v944 = vpack.c.bf16 %v937, %v937
    %945 = vmatpush.bf16.msra.mxu0 %v547
    %946 = vmatpush.bf16.msra.mxu0 %v544
    %947 = vmatpush.bf16.msra.mxu0 %v541
    %948 = vmatpush.bf16.msra.mxu0 %v538
    %949 = vmatpush.bf16.msra.mxu0 %v535
    %950 = vmatpush.bf16.msra.mxu0 %v532
    %951 = vmatpush.bf16.msra.mxu0 %v529
    %952 = vmatpush.bf16.msra.mxu0 %v526
    %953 = vmatmul.bf16.gmra.mxu0 %v944
    %v954 = vpop.f32.mrf.mxu0
    %v955 = vadd.f32 0.0, %v954
    %v956 = vpop.f32.mrf.mxu0
    %957 = vdwg.mxu0
    %958 = vmatpush.bf16.msra.mxu0 %v548
    %959 = vmatpush.bf16.msra.mxu0 %v545
    %960 = vmatpush.bf16.msra.mxu0 %v542
    %961 = vmatpush.bf16.msra.mxu0 %v539
    %962 = vmatpush.bf16.msra.mxu0 %v536
    %963 = vmatpush.bf16.msra.mxu0 %v533
    %964 = vmatpush.bf16.msra.mxu0 %v530
    %965 = vmatpush.bf16.msra.mxu0 %v527
    %966 = vmatmul.bf16.gmra.mxu0 %v944
    %v967 = vpop.f32.mrf.mxu0
    %v968 = vadd.f32 0.0, %v967
    %v969 = vpop.f32.mrf.mxu0
    %970 = vdwg.mxu0
    %971 = vmatpush.bf16.msra.mxu0 %v549
    %972 = vmatpush.bf16.msra.mxu0 %v546
    %973 = vmatpush.bf16.msra.mxu0 %v543
    %974 = vmatpush.bf16.msra.mxu0 %v540
    %975 = vmatpush.bf16.msra.mxu0 %v537
    %976 = vmatpush.bf16.msra.mxu0 %v534
    %977 = vmatpush.bf16.msra.mxu0 %v531
    %978 = vmatpush.bf16.msra.mxu0 %v528
    %979 = vmatmul.bf16.gmra.mxu0 %v944
    %v980 = vpop.f32.mrf.mxu0
    %v981 = vadd.f32 0.0, %v980
    %v982 = vpop.f32.mrf.mxu0
    %983 = vdwg.mxu0
    %v984 = vadd.f32 %v941, %v955
    %v985 = vxor.u32 %v984, 2147483648
    %v986 = vmul.f32 %v985, 1.442695
    %v987 = vpow.pop %v986
    %v988 = vadd.f32 %v987, 1.0
    %v989 = vrcp.pop %v988
    %v990 = vmul.f32 %v988, %v989
    %v991 = vsub.f32 1.0, %v990
    %v992 = vmul.f32 %v989, %v991
    %v993 = vadd.f32 %v989, %v992
    %vm994 = vweird.f32 %v988
    %vm995 = vweird.f32 %v989
    %vm996 = vmor %vm994, %vm995
    %v997 = vsel %vm996, %v989, %v993
    %v998 = vand.u32 2147483647, %v988
    %vm999 = vcmp.eq.f32.partialorder %v998, 8.507059e+37
    %v1000 = vand.u32 %v988, 2147483648
    %v1001 = vor.u32 1.1754944e-38, %v1000
    %v1002 = vsel %vm999, %v1001, %v997
    %v1003 = vmul.f32 1.0, %v1002
    %v1004 = vadd.f32 %v942, %v968
    %v1005 = vxor.u32 %v1004, 2147483648
    %v1006 = vmul.f32 %v1005, 1.442695
    %v1007 = vpow.pop %v1006
    %v1008 = vadd.f32 %v1007, 1.0
    %v1009 = vrcp.pop %v1008
    %v1010 = vmul.f32 %v1008, %v1009
    %v1011 = vsub.f32 1.0, %v1010
    %v1012 = vmul.f32 %v1009, %v1011
    %v1013 = vadd.f32 %v1009, %v1012
    %vm1014 = vweird.f32 %v1008
    %vm1015 = vweird.f32 %v1009
    %vm1016 = vmor %vm1014, %vm1015
    %v1017 = vsel %vm1016, %v1009, %v1013
    %v1018 = vand.u32 2147483647, %v1008
    %vm1019 = vcmp.eq.f32.partialorder %v1018, 8.507059e+37
    %v1020 = vand.u32 %v1008, 2147483648
    %v1021 = vor.u32 1.1754944e-38, %v1020
    %v1022 = vsel %vm1019, %v1021, %v1017
    %v1023 = vmul.f32 1.0, %v1022
    %v1024 = vadd.f32 %v981, %v439
    %v1025 = vmul.f32 %v1003, %v1024
    %v1026 = vadd.f32 %v943, %v1025
    %v1027 = vtanh.pop %v1026
    %v1028 = vsub.f32 %v937, %v1027
    %v1029 = vmul.f32 %v1023, %v1028
    %v1030 = vadd.f32 %v1027, %v1029
    %s1031 = scalar_lea.vmem [#allocation11], 32
    %1032 = vst [vmem:[%s1031] sm:$0xff] %v1030
    %s1033 = scalar_lea.vmem [#allocation2], 120
    %v1034 = vld [vmem:[%s1033] sm:$0xff]
    %v1035 = vld [vmem:[%s1033 + $0x8] sm:$0xff]
    %v1036 = vld [vmem:[%s1033 + $0x10] sm:$0xff]
    %v1037 = vpack.c.bf16 %v1030, %v1030
    %1038 = vmatpush.bf16.msra.mxu0 %v547
    %1039 = vmatpush.bf16.msra.mxu0 %v544
    %1040 = vmatpush.bf16.msra.mxu0 %v541
    %1041 = vmatpush.bf16.msra.mxu0 %v538
    %1042 = vmatpush.bf16.msra.mxu0 %v535
    %1043 = vmatpush.bf16.msra.mxu0 %v532
    %1044 = vmatpush.bf16.msra.mxu0 %v529
    %1045 = vmatpush.bf16.msra.mxu0 %v526
    %1046 = vmatmul.bf16.gmra.mxu0 %v1037
    %v1047 = vpop.f32.mrf.mxu0
    %v1048 = vadd.f32 0.0, %v1047
    %v1049 = vpop.f32.mrf.mxu0
    %1050 = vdwg.mxu0
    %1051 = vmatpush.bf16.msra.mxu0 %v548
    %1052 = vmatpush.bf16.msra.mxu0 %v545
    %1053 = vmatpush.bf16.msra.mxu0 %v542
    %1054 = vmatpush.bf16.msra.mxu0 %v539
    %1055 = vmatpush.bf16.msra.mxu0 %v536
    %1056 = vmatpush.bf16.msra.mxu0 %v533
    %1057 = vmatpush.bf16.msra.mxu0 %v530
    %1058 = vmatpush.bf16.msra.mxu0 %v527
    %1059 = vmatmul.bf16.gmra.mxu0 %v1037
    %v1060 = vpop.f32.mrf.mxu0
    %v1061 = vadd.f32 0.0, %v1060
    %v1062 = vpop.f32.mrf.mxu0
    %1063 = vdwg.mxu0
    %1064 = vmatpush.bf16.msra.mxu0 %v549
    %1065 = vmatpush.bf16.msra.mxu0 %v546
    %1066 = vmatpush.bf16.msra.mxu0 %v543
    %1067 = vmatpush.bf16.msra.mxu0 %v540
    %1068 = vmatpush.bf16.msra.mxu0 %v537
    %1069 = vmatpush.bf16.msra.mxu0 %v534
    %1070 = vmatpush.bf16.msra.mxu0 %v531
    %1071 = vmatpush.bf16.msra.mxu0 %v528
    %1072 = vmatmul.bf16.gmra.mxu0 %v1037
    %v1073 = vpop.f32.mrf.mxu0
    %v1074 = vadd.f32 0.0, %v1073
    %v1075 = vpop.f32.mrf.mxu0
    %1076 = vdwg.mxu0
    %v1077 = vadd.f32 %v1034, %v1048
    %v1078 = vxor.u32 %v1077, 2147483648
    %v1079 = vmul.f32 %v1078, 1.442695
    %v1080 = vpow.pop %v1079
    %v1081 = vadd.f32 %v1080, 1.0
    %v1082 = vrcp.pop %v1081
    %v1083 = vmul.f32 %v1081, %v1082
    %v1084 = vsub.f32 1.0, %v1083
    %v1085 = vmul.f32 %v1082, %v1084
    %v1086 = vadd.f32 %v1082, %v1085
    %vm1087 = vweird.f32 %v1081
    %vm1088 = vweird.f32 %v1082
    %vm1089 = vmor %vm1087, %vm1088
    %v1090 = vsel %vm1089, %v1082, %v1086
    %v1091 = vand.u32 2147483647, %v1081
    %vm1092 = vcmp.eq.f32.partialorder %v1091, 8.507059e+37
    %v1093 = vand.u32 %v1081, 2147483648
    %v1094 = vor.u32 1.1754944e-38, %v1093
    %v1095 = vsel %vm1092, %v1094, %v1090
    %v1096 = vmul.f32 1.0, %v1095
    %v1097 = vadd.f32 %v1035, %v1061
    %v1098 = vxor.u32 %v1097, 2147483648
    %v1099 = vmul.f32 %v1098, 1.442695
    %v1100 = vpow.pop %v1099
    %v1101 = vadd.f32 %v1100, 1.0
    %v1102 = vrcp.pop %v1101
    %v1103 = vmul.f32 %v1101, %v1102
    %v1104 = vsub.f32 1.0, %v1103
    %v1105 = vmul.f32 %v1102, %v1104
    %v1106 = vadd.f32 %v1102, %v1105
    %vm1107 = vweird.f32 %v1101
    %vm1108 = vweird.f32 %v1102
    %vm1109 = vmor %vm1107, %vm1108
    %v1110 = vsel %vm1109, %v1102, %v1106
    %v1111 = vand.u32 2147483647, %v1101
    %vm1112 = vcmp.eq.f32.partialorder %v1111, 8.507059e+37
    %v1113 = vand.u32 %v1101, 2147483648
    %v1114 = vor.u32 1.1754944e-38, %v1113
    %v1115 = vsel %vm1112, %v1114, %v1110
    %v1116 = vmul.f32 1.0, %v1115
    %v1117 = vadd.f32 %v1074, %v439
    %v1118 = vmul.f32 %v1096, %v1117
    %v1119 = vadd.f32 %v1036, %v1118
    %v1120 = vtanh.pop %v1119
    %v1121 = vsub.f32 %v1030, %v1120
    %v1122 = vmul.f32 %v1116, %v1121
    %v1123 = vadd.f32 %v1120, %v1122
    %s1124 = scalar_lea.vmem [#allocation11], 40
    %1125 = vst [vmem:[%s1124] sm:$0xff] %v1123
    %s1126 = scalar_lea.vmem [#allocation2], 144
    %v1127 = vld [vmem:[%s1126] sm:$0xff]
    %v1128 = vld [vmem:[%s1126 + $0x8] sm:$0xff]
    %v1129 = vld [vmem:[%s1126 + $0x10] sm:$0xff]
    %v1130 = vpack.c.bf16 %v1123, %v1123
    %1131 = vmatpush.bf16.msra.mxu0 %v547
    %1132 = vmatpush.bf16.msra.mxu0 %v544
    %1133 = vmatpush.bf16.msra.mxu0 %v541
    %1134 = vmatpush.bf16.msra.mxu0 %v538
    %1135 = vmatpush.bf16.msra.mxu0 %v535
    %1136 = vmatpush.bf16.msra.mxu0 %v532
    %1137 = vmatpush.bf16.msra.mxu0 %v529
    %1138 = vmatpush.bf16.msra.mxu0 %v526
    %1139 = vmatmul.bf16.gmra.mxu0 %v1130
    %v1140 = vpop.f32.mrf.mxu0
    %v1141 = vadd.f32 0.0, %v1140
    %v1142 = vpop.f32.mrf.mxu0
    %1143 = vdwg.mxu0
    %1144 = vmatpush.bf16.msra.mxu0 %v548
    %1145 = vmatpush.bf16.msra.mxu0 %v545
    %1146 = vmatpush.bf16.msra.mxu0 %v542
    %1147 = vmatpush.bf16.msra.mxu0 %v539
    %1148 = vmatpush.bf16.msra.mxu0 %v536
    %1149 = vmatpush.bf16.msra.mxu0 %v533
    %1150 = vmatpush.bf16.msra.mxu0 %v530
    %1151 = vmatpush.bf16.msra.mxu0 %v527
    %1152 = vmatmul.bf16.gmra.mxu0 %v1130
    %v1153 = vpop.f32.mrf.mxu0
    %v1154 = vadd.f32 0.0, %v1153
    %v1155 = vpop.f32.mrf.mxu0
    %1156 = vdwg.mxu0
    %1157 = vmatpush.bf16.msra.mxu0 %v549
    %1158 = vmatpush.bf16.msra.mxu0 %v546
    %1159 = vmatpush.bf16.msra.mxu0 %v543
    %1160 = vmatpush.bf16.msra.mxu0 %v540
    %1161 = vmatpush.bf16.msra.mxu0 %v537
    %1162 = vmatpush.bf16.msra.mxu0 %v534
    %1163 = vmatpush.bf16.msra.mxu0 %v531
    %1164 = vmatpush.bf16.msra.mxu0 %v528
    %1165 = vmatmul.bf16.gmra.mxu0 %v1130
    %v1166 = vpop.f32.mrf.mxu0
    %v1167 = vadd.f32 0.0, %v1166
    %v1168 = vpop.f32.mrf.mxu0
    %1169 = vdwg.mxu0
    %v1170 = vadd.f32 %v1127, %v1141
    %v1171 = vxor.u32 %v1170, 2147483648
    %v1172 = vmul.f32 %v1171, 1.442695
    %v1173 = vpow.pop %v1172
    %v1174 = vadd.f32 %v1173, 1.0
    %v1175 = vrcp.pop %v1174
    %v1176 = vmul.f32 %v1174, %v1175
    %v1177 = vsub.f32 1.0, %v1176
    %v1178 = vmul.f32 %v1175, %v1177
    %v1179 = vadd.f32 %v1175, %v1178
    %vm1180 = vweird.f32 %v1174
    %vm1181 = vweird.f32 %v1175
    %vm1182 = vmor %vm1180, %vm1181
    %v1183 = vsel %vm1182, %v1175, %v1179
    %v1184 = vand.u32 2147483647, %v1174
    %vm1185 = vcmp.eq.f32.partialorder %v1184, 8.507059e+37
    %v1186 = vand.u32 %v1174, 2147483648
    %v1187 = vor.u32 1.1754944e-38, %v1186
    %v1188 = vsel %vm1185, %v1187, %v1183
    %v1189 = vmul.f32 1.0, %v1188
    %v1190 = vadd.f32 %v1128, %v1154
    %v1191 = vxor.u32 %v1190, 2147483648
    %v1192 = vmul.f32 %v1191, 1.442695
    %v1193 = vpow.pop %v1192
    %v1194 = vadd.f32 %v1193, 1.0
    %v1195 = vrcp.pop %v1194
    %v1196 = vmul.f32 %v1194, %v1195
    %v1197 = vsub.f32 1.0, %v1196
    %v1198 = vmul.f32 %v1195, %v1197
    %v1199 = vadd.f32 %v1195, %v1198
    %vm1200 = vweird.f32 %v1194
    %vm1201 = vweird.f32 %v1195
    %vm1202 = vmor %vm1200, %vm1201
    %v1203 = vsel %vm1202, %v1195, %v1199
    %v1204 = vand.u32 2147483647, %v1194
    %vm1205 = vcmp.eq.f32.partialorder %v1204, 8.507059e+37
    %v1206 = vand.u32 %v1194, 2147483648
    %v1207 = vor.u32 1.1754944e-38, %v1206
    %v1208 = vsel %vm1205, %v1207, %v1203
    %v1209 = vmul.f32 1.0, %v1208
    %v1210 = vadd.f32 %v1167, %v439
    %v1211 = vmul.f32 %v1189, %v1210
    %v1212 = vadd.f32 %v1129, %v1211
    %v1213 = vtanh.pop %v1212
    %v1214 = vsub.f32 %v1123, %v1213
    %v1215 = vmul.f32 %v1209, %v1214
    %v1216 = vadd.f32 %v1213, %v1215
    %s1217 = scalar_lea.vmem [#allocation11], 48
    %1218 = vst [vmem:[%s1217] sm:$0xff] %v1216
    %s1219 = scalar_lea.vmem [#allocation2], 168
    %v1220 = vld [vmem:[%s1219] sm:$0xff]
    %v1221 = vld [vmem:[%s1219 + $0x8] sm:$0xff]
    %v1222 = vld [vmem:[%s1219 + $0x10] sm:$0xff]
    %v1223 = vpack.c.bf16 %v1216, %v1216
    %1224 = vmatpush.bf16.msra.mxu0 %v547
    %1225 = vmatpush.bf16.msra.mxu0 %v544
    %1226 = vmatpush.bf16.msra.mxu0 %v541
    %1227 = vmatpush.bf16.msra.mxu0 %v538
    %1228 = vmatpush.bf16.msra.mxu0 %v535
    %1229 = vmatpush.bf16.msra.mxu0 %v532
    %1230 = vmatpush.bf16.msra.mxu0 %v529
    %1231 = vmatpush.bf16.msra.mxu0 %v526
    %1232 = vmatmul.bf16.gmra.mxu0 %v1223
    %v1233 = vpop.f32.mrf.mxu0
    %v1234 = vadd.f32 0.0, %v1233
    %v1235 = vpop.f32.mrf.mxu0
    %1236 = vdwg.mxu0
    %1237 = vmatpush.bf16.msra.mxu0 %v548
    %1238 = vmatpush.bf16.msra.mxu0 %v545
    %1239 = vmatpush.bf16.msra.mxu0 %v542
    %1240 = vmatpush.bf16.msra.mxu0 %v539
    %1241 = vmatpush.bf16.msra.mxu0 %v536
    %1242 = vmatpush.bf16.msra.mxu0 %v533
    %1243 = vmatpush.bf16.msra.mxu0 %v530
    %1244 = vmatpush.bf16.msra.mxu0 %v527
    %1245 = vmatmul.bf16.gmra.mxu0 %v1223
    %v1246 = vpop.f32.mrf.mxu0
    %v1247 = vadd.f32 0.0, %v1246
    %v1248 = vpop.f32.mrf.mxu0
    %1249 = vdwg.mxu0
    %1250 = vmatpush.bf16.msra.mxu0 %v549
    %1251 = vmatpush.bf16.msra.mxu0 %v546
    %1252 = vmatpush.bf16.msra.mxu0 %v543
    %1253 = vmatpush.bf16.msra.mxu0 %v540
    %1254 = vmatpush.bf16.msra.mxu0 %v537
    %1255 = vmatpush.bf16.msra.mxu0 %v534
    %1256 = vmatpush.bf16.msra.mxu0 %v531
    %1257 = vmatpush.bf16.msra.mxu0 %v528
    %1258 = vmatmul.bf16.gmra.mxu0 %v1223
    %v1259 = vpop.f32.mrf.mxu0
    %v1260 = vadd.f32 0.0, %v1259
    %v1261 = vpop.f32.mrf.mxu0
    %1262 = vdwg.mxu0
    %v1263 = vadd.f32 %v1220, %v1234
    %v1264 = vxor.u32 %v1263, 2147483648
    %v1265 = vmul.f32 %v1264, 1.442695
    %v1266 = vpow.pop %v1265
    %v1267 = vadd.f32 %v1266, 1.0
    %v1268 = vrcp.pop %v1267
    %v1269 = vmul.f32 %v1267, %v1268
    %v1270 = vsub.f32 1.0, %v1269
    %v1271 = vmul.f32 %v1268, %v1270
    %v1272 = vadd.f32 %v1268, %v1271
    %vm1273 = vweird.f32 %v1267
    %vm1274 = vweird.f32 %v1268
    %vm1275 = vmor %vm1273, %vm1274
    %v1276 = vsel %vm1275, %v1268, %v1272
    %v1277 = vand.u32 2147483647, %v1267
    %vm1278 = vcmp.eq.f32.partialorder %v1277, 8.507059e+37
    %v1279 = vand.u32 %v1267, 2147483648
    %v1280 = vor.u32 1.1754944e-38, %v1279
    %v1281 = vsel %vm1278, %v1280, %v1276
    %v1282 = vmul.f32 1.0, %v1281
    %v1283 = vadd.f32 %v1221, %v1247
    %v1284 = vxor.u32 %v1283, 2147483648
    %v1285 = vmul.f32 %v1284, 1.442695
    %v1286 = vpow.pop %v1285
    %v1287 = vadd.f32 %v1286, 1.0
    %v1288 = vrcp.pop %v1287
    %v1289 = vmul.f32 %v1287, %v1288
    %v1290 = vsub.f32 1.0, %v1289
    %v1291 = vmul.f32 %v1288, %v1290
    %v1292 = vadd.f32 %v1288, %v1291
    %vm1293 = vweird.f32 %v1287
    %vm1294 = vweird.f32 %v1288
    %vm1295 = vmor %vm1293, %vm1294
    %v1296 = vsel %vm1295, %v1288, %v1292
    %v1297 = vand.u32 2147483647, %v1287
    %vm1298 = vcmp.eq.f32.partialorder %v1297, 8.507059e+37
    %v1299 = vand.u32 %v1287, 2147483648
    %v1300 = vor.u32 1.1754944e-38, %v1299
    %v1301 = vsel %vm1298, %v1300, %v1296
    %v1302 = vmul.f32 1.0, %v1301
    %v1303 = vadd.f32 %v1260, %v439
    %v1304 = vmul.f32 %v1282, %v1303
    %v1305 = vadd.f32 %v1222, %v1304
    %v1306 = vtanh.pop %v1305
    %v1307 = vsub.f32 %v1216, %v1306
    %v1308 = vmul.f32 %v1302, %v1307
    %v1309 = vadd.f32 %v1306, %v1308
    %s1310 = scalar_lea.vmem [#allocation11], 56
    %1311 = vst [vmem:[%s1310] sm:$0xff] %v1309
    %1312 = vst [vmem:[#allocation12] sm:$0xff] %v1309
    // Predicated region
    $region46: #{tpu_custom_call.1} parent=1 // pred_check
      _
    $region47: #{tpu_custom_call.1} parent=1 // pred_check_branch
      %1314 = sbr.rel (0) target = $region49
    $region48: #{tpu_custom_call.1} parent=1 // pred_region
      %1316 = vsyncadd [#allocation5], 0
      %s1317 = sshll.u32 [#allocation11], 4
      %s1318 = int_to_ptr.vmem [resolvable:$true] %s1317
      %s1319 = sshll.u32 %s6, 4
      %s1320 = int_to_ptr.hbm [resolvable:$true] %s1319
      %1325 = dma.vmem_to_hbm [thread:$0]  %s1318, 1024, %s1320, [#allocation5], 128, 128, 8
    $region49: #{tpu_custom_call.1} parent=1 // pred_fallthru
      _
    // Predicated region
    $region50: #{tpu_custom_call.1} parent=1 // pred_check
      _
    $region51: #{tpu_custom_call.1} parent=1 // pred_check_branch
      %1327 = sbr.rel (0) target = $region53
    $region52: #{tpu_custom_call.1} parent=1 // pred_region
      %1329 = vsyncadd [#allocation13], 0
      %s1331 = sshll.u32 [#allocation12], 4
      %s1332 = int_to_ptr.vmem [resolvable:$true] %s1331
      %s1333 = sshll.u32 %s7, 4
      %s1334 = int_to_ptr.hbm [resolvable:$true] %s1333
      %1336 = dma.vmem_to_hbm [thread:$0]  %s1332, 128, %s1334, [#allocation13]
    $region53: #{tpu_custom_call.1} parent=1 // pred_fallthru
      _
    // Predicated region
    $region54: #{tpu_custom_call.1} parent=1 // pred_check
      _
    $region55: #{tpu_custom_call.1} parent=1 // pred_check_branch
      %1338 = sbr.rel (0) target = $region57
    $region56: #{tpu_custom_call.1} parent=1 // pred_region
      %1340 = dma.done [#allocation5], 1024
    $region57: #{tpu_custom_call.1} parent=1 // pred_fallthru
      _
    // Predicated region
    $region58: #{tpu_custom_call.1} parent=1 // pred_check
      _
    $region59: #{tpu_custom_call.1} parent=1 // pred_check_branch
      %1342 = sbr.rel (0) target = $region61
    $region60: #{tpu_custom_call.1} parent=1 // pred_region
      %1344 = dma.done [#allocation13], 128
    $region61: #{tpu_custom_call.1} parent=1 // pred_fallthru
      _
    %1345 = vsyncpa [#allocation4], 1
    %1346 = vsyncpa [#allocation7], 1
    %1347 = vsyncpa [#allocation10], 1
    %1348 = vsyncpa [#allocation5], 1
    %1349 = vsyncpa [#allocation13], 1

</llo_original>
